<compile_context>
chip_gen: v5e
topology: v5e:2x2
jax: 0.10.0
libtpu: 0.0.40
codegen_flags: <defaults>
</compile_context>

<pallas_src>
import functools

import jax
import jax.numpy as jnp
import numpy as np
from jax.experimental import pallas as pl
from jax.experimental.pallas import tpu as pltpu


def _residual_unit_kernel(x_ref, w1_ref, s1_ref, b1_ref, w2_ref, s2_ref,
                          b2_ref, w3_ref, *rest, H, W, Cin, Cint, Cout,
                          stride, has_shortcut, rows_per_block):
    if has_shortcut:
        ws_ref, o_ref, pad_ref = rest
    else:
        o_ref, pad_ref = rest

    Ho = (H - 1) // stride + 1
    Wo = (W - 1) // stride + 1

    # Hoist all weight / BN-parameter loads: the row-block loop below is
    # Python-unrolled, so re-loading inside it would re-emit loads/broadcasts
    # (JAX does not CSE broadcast_in_dim).
    w1 = w1_ref[...]
    s1 = s1_ref[...]
    b1 = b1_ref[...]
    w2 = w2_ref[...]            # (9*Cint, Cint), tap-major (t = dy*3 + dx)
    s2 = s2_ref[...]
    b2 = b2_ref[...]
    w3 = w3_ref[...]
    ws = ws_ref[...] if has_shortcut else None

    # Zero only the halo border of the padded scratch; the interior is fully
    # overwritten below.  Done every grid step (not @pl.when(step==0)) so it
    # stays correct when the parallel batch axis is sharded across TensorCores.
    zrow = jnp.zeros((1, W + 2, Cint), jnp.float32)
    zcol = jnp.zeros((H + 2, 1, Cint), jnp.float32)
    pad_ref[pl.ds(0, 1), :, :] = zrow
    pad_ref[pl.ds(H + 1, 1), :, :] = zrow
    pad_ref[:, pl.ds(0, 1), :] = zcol
    pad_ref[:, pl.ds(W + 1, 1), :] = zcol

    # conv1 (1x1) -> BN1 -> ReLU as one (H*W, Cin) @ (Cin, Cint) matmul.
    x_all = x_ref[0].astype(jnp.float32).reshape(H * W, Cin)
    h1 = jnp.dot(x_all, w1, preferred_element_type=jnp.float32)
    h1 = jnp.maximum(h1 * s1 + b1, 0.0)
    pad_ref[pl.ds(1, H), pl.ds(1, W), :] = h1.reshape(H, W, Cint)

    # conv2 (3x3) -> BN2 -> ReLU -> conv3 (1x1) (+ shortcut) over row blocks.
    for io0 in range(0, Ho, rows_per_block):
        r = min(rows_per_block, Ho - io0)
        m = r * Wo

        # im2col: nine shifted tap slices concatenated along the channel
        # (lane) dim -> one (m, 9*Cint) LHS and a single MXU call per block.
        taps = []
        for dy in range(3):
            for dx in range(3):
                if stride == 1:
                    sl = pad_ref[pl.ds(io0 + dy, r), pl.ds(dx, Wo), :]
                else:
                    sl = pad_ref[pl.ds(io0 * stride + dy, r, stride),
                                 pl.ds(dx, Wo, stride), :]
                taps.append(sl.reshape(m, Cint))
        lhs = jnp.concatenate(taps, axis=1)                              # (m, 9*Cint)
        h2 = jnp.dot(lhs, w2, preferred_element_type=jnp.float32)        # (m, Cint)
        h2 = jnp.maximum(h2 * s2 + b2, 0.0)
        out_blk = jnp.dot(h2, w3, preferred_element_type=jnp.float32)    # (m, Cout)

        if has_shortcut:
            if stride == 1:
                xs = x_ref[0, pl.ds(io0, r), :, :]
            else:
                xs = x_ref[0, pl.ds(io0 * stride, r, stride),
                           pl.ds(0, Wo, stride), :]
            skip = jnp.dot(xs.astype(jnp.float32).reshape(m, Cin), ws,
                           preferred_element_type=jnp.float32)
        else:
            # Identity shortcut (stride == 1 and Cin == Cout): no matmul.
            skip = x_ref[0, pl.ds(io0, r), :, :].astype(
                jnp.float32).reshape(m, Cout)

        o_ref[0, pl.ds(io0, r), :, :] = (out_blk + skip).reshape(
            r, Wo, Cout).astype(o_ref.dtype)


def hovernet_residual_unit(x_nchw, params, stride):
    """Pallas implementation of _HoVerNetResidualUnit.forward (NCHW in/out)."""
    N, Cin, H, W = x_nchw.shape
    Cint = params["w1"].shape[1]
    Cout = params["w3"].shape[1]
    Ho = (H - 1) // stride + 1
    Wo = (W - 1) // stride + 1
    has_shortcut = (stride != 1) or (Cin != Cout)

    x = jnp.transpose(x_nchw, (0, 2, 3, 1)).astype(jnp.float32)     # NHWC
    w2_flat = params["w2"].reshape(9 * Cint, Cint)                  # im2col weight

    # Block enough output rows together that each MXU call sees M = rows*Wo of
    # roughly 128+ (8 rows for the 16x16 test case).
    rows_per_block = max(1, min(Ho, -(-128 // Wo)))

    kernel = functools.partial(
        _residual_unit_kernel, H=H, W=W, Cin=Cin, Cint=Cint, Cout=Cout,
        stride=stride, has_shortcut=has_shortcut,
        rows_per_block=rows_per_block)

    in_specs = [
        pl.BlockSpec((1, H, W, Cin), lambda n: (n, 0, 0, 0)),       # x
        pl.BlockSpec((Cin, Cint), lambda n: (0, 0)),                # w1
        pl.BlockSpec((1, Cint), lambda n: (0, 0)),                  # bn1 scale
        pl.BlockSpec((1, Cint), lambda n: (0, 0)),                  # bn1 bias
        pl.BlockSpec((9 * Cint, Cint), lambda n: (0, 0)),           # w2 (im2col)
        pl.BlockSpec((1, Cint), lambda n: (0, 0)),                  # bn2 scale
        pl.BlockSpec((1, Cint), lambda n: (0, 0)),                  # bn2 bias
        pl.BlockSpec((Cint, Cout), lambda n: (0, 0)),               # w3
    ]
    args = [x, params["w1"], params["s1"], params["b1"], w2_flat,
            params["s2"], params["b2"], params["w3"]]
    if has_shortcut:
        in_specs.append(pl.BlockSpec((Cin, Cout), lambda n: (0, 0)))  # shortcut
        args.append(params["ws"])

    out_nhwc = pl.pallas_call(
        kernel,
        out_shape=jax.ShapeDtypeStruct((N, Ho, Wo, Cout), jnp.float32),
        grid_spec=pltpu.PrefetchScalarGridSpec(
            num_scalar_prefetch=0,
            grid=(N,),
            in_specs=in_specs,
            out_specs=pl.BlockSpec((1, Ho, Wo, Cout), lambda n: (n, 0, 0, 0)),
            scratch_shapes=[pltpu.VMEM((H + 2, W + 2, Cint), jnp.float32)],
        ),
        compiler_params=pltpu.CompilerParams(
            dimension_semantics=("parallel",)),   # batch elements independent
    )(*args)

    return jnp.transpose(out_nhwc, (0, 3, 1, 2))  # back to NCHW


def init_params(key, input_channels, output_channels, stride):
    """Deterministic synthetic parameters matching the PyTorch module's shapes."""
    Cin, Cout = input_channels, output_channels
    Cint = Cout // 4
    ks = jax.random.split(key, 6)

    def conv_weight(k, cout, cin, kh, kw):
        bound = 1.0 / np.sqrt(cin * kh * kw)
        return jax.random.uniform(k, (cout, cin, kh, kw), jnp.float32, -bound, bound)

    w1_t = conv_weight(ks[0], Cint, Cin, 1, 1)   # torch (out, in, 1, 1)
    w2_t = conv_weight(ks[1], Cint, Cint, 3, 3)  # torch (out, in, 3, 3)
    w3_t = conv_weight(ks[2], Cout, Cint, 1, 1)

    def bn_folded(k, c):
        kg, kb, km, kv = jax.random.split(k, 4)
        gamma = jax.random.uniform(kg, (c,), jnp.float32, 0.5, 1.5)
        beta = jax.random.uniform(kb, (c,), jnp.float32, -0.5, 0.5)
        mean = jax.random.uniform(km, (c,), jnp.float32, -0.5, 0.5)
        var = jax.random.uniform(kv, (c,), jnp.float32, 0.5, 1.5)
        scale = gamma / jnp.sqrt(var + 1e-5)
        bias = beta - mean * scale
        return scale.reshape(1, c), bias.reshape(1, c)

    s1, b1 = bn_folded(ks[3], Cint)
    s2, b2 = bn_folded(ks[4], Cint)

    if stride != 1 or Cin != Cout:
        ws_t = conv_weight(ks[5], Cout, Cin, 1, 1)
        ws = jnp.transpose(ws_t[:, :, 0, 0])          # (Cin, Cout)
    else:
        ws = jnp.eye(Cin, dtype=jnp.float32)          # identity shortcut (unused in kernel)

    w1 = jnp.transpose(w1_t[:, :, 0, 0])              # (Cin, Cint)
    w3 = jnp.transpose(w3_t[:, :, 0, 0])              # (Cint, Cout)
    w2 = jnp.stack([jnp.transpose(w2_t[:, :, dy, dx])  # tap t=dy*3+dx: (in, out)
                    for dy in range(3) for dx in range(3)], axis=0)  # (9, Cint, Cint)

    return dict(w1=w1, s1=s1, b1=b1, w2=w2, s2=s2, b2=b2, w3=w3, ws=ws)


def reference_forward_nchw(x_nchw, params, stride):
    """Plain NumPy reference of the residual unit (for correctness check)."""
    x = np.transpose(np.asarray(x_nchw, np.float32), (0, 2, 3, 1))  # NHWC
    p = {k: np.asarray(v) for k, v in params.items()}

    def conv1x1(x, w, s):
        return np.einsum("nhwc,cd->nhwd", x[:, ::s, ::s, :], w)

    def conv3x3_same(x, w_taps, s):
        N, H, W, C = x.shape
        D = w_taps.shape[-1]
        Ho = (H - 1) // s + 1
        Wo = (W - 1) // s + 1
        xp = np.zeros((N, H + 2, W + 2, C), np.float32)
        xp[:, 1:H + 1, 1:W + 1, :] = x
        out = np.zeros((N, Ho, Wo, D), np.float32)
        for dy in range(3):
            for dx in range(3):
                sl = xp[:, dy:dy + (Ho - 1) * s + 1:s, dx:dx + (Wo - 1) * s + 1:s, :]
                out += np.einsum("nhwc,cd->nhwd", sl, w_taps[dy * 3 + dx])
        return out

    skip = conv1x1(x, p["ws"], stride)
    h = conv1x1(x, p["w1"], 1)
    h = np.maximum(h * p["s1"] + p["b1"], 0.0)
    h = conv3x3_same(h, p["w2"], stride)
    h = np.maximum(h * p["s2"] + p["b2"], 0.0)
    h = conv1x1(h, p["w3"], 1)
    out = h + skip
    return np.transpose(out, (0, 3, 1, 2))  # NCHW


def _check(key, N, Cin, H, W, Cout, stride):
    kx, kp = jax.random.split(key)
    x = jax.random.normal(kx, (N, Cin, H, W), jnp.float32)
    params = init_params(kp, Cin, Cout, stride)
    out = jax.block_until_ready(hovernet_residual_unit(x, params, stride))
    ref = reference_forward_nchw(np.asarray(x), params, stride)
    assert out.shape == ref.shape, (out.shape, ref.shape)
    np.testing.assert_allclose(np.asarray(out), ref, atol=2e-3, rtol=2e-3)


if __name__ == "__main__":
    key = jax.random.PRNGKey(0)
    k1, k2 = jax.random.split(key)
    # Projection-shortcut configuration (Cin != Cout -> 1x1 shortcut conv).
    _check(k1, N=2, Cin=4, H=16, W=16, Cout=16, stride=1)
    # Identity-shortcut configuration (Cin == Cout, stride == 1 -> no shortcut matmul).
    _check(k2, N=2, Cin=16, H=16, W=16, Cout=16, stride=1)
    print("KERNEL_OK")
</pallas_src>

<mosaic_0001>
module attributes {stable_mosaic.version = 11 : i64} {
  func.func @_residual_unit_kernel(%arg0: i32, %arg1: memref<1x16x16x4xf32, #tpu.memory_space<vmem>>, %arg2: memref<4x4xf32, #tpu.memory_space<vmem>>, %arg3: memref<1x4xf32, #tpu.memory_space<vmem>>, %arg4: memref<1x4xf32, #tpu.memory_space<vmem>>, %arg5: memref<36x4xf32, #tpu.memory_space<vmem>>, %arg6: memref<1x4xf32, #tpu.memory_space<vmem>>, %arg7: memref<1x4xf32, #tpu.memory_space<vmem>>, %arg8: memref<4x16xf32, #tpu.memory_space<vmem>>, %arg9: memref<4x16xf32, #tpu.memory_space<vmem>>, %arg10: memref<1x16x16x16xf32, #tpu.memory_space<vmem>>, %arg11: memref<18x18x4xf32, #tpu.memory_space<vmem>>) attributes {dimension_semantics = [#tpu.dimension_semantics<parallel>], iteration_bounds = array<i64: 2>, scalar_prefetch = 0 : i64, scratch_operands = 1 : i64, tpu.core_type = #tpu.core_type<tc>, window_params = [{transform_indices = @transform_0, window_bounds = array<i64: 1, 16, 16, 4>}, {pipeline_mode = #tpu.pipeline_mode<synchronous>, transform_indices = @transform_1, window_bounds = array<i64: 4, 4>}, {pipeline_mode = #tpu.pipeline_mode<synchronous>, transform_indices = @transform_2, window_bounds = array<i64: 1, 4>}, {pipeline_mode = #tpu.pipeline_mode<synchronous>, transform_indices = @transform_3, window_bounds = array<i64: 1, 4>}, {pipeline_mode = #tpu.pipeline_mode<synchronous>, transform_indices = @transform_4, window_bounds = array<i64: 36, 4>}, {pipeline_mode = #tpu.pipeline_mode<synchronous>, transform_indices = @transform_5, window_bounds = array<i64: 1, 4>}, {pipeline_mode = #tpu.pipeline_mode<synchronous>, transform_indices = @transform_6, window_bounds = array<i64: 1, 4>}, {pipeline_mode = #tpu.pipeline_mode<synchronous>, transform_indices = @transform_7, window_bounds = array<i64: 4, 16>}, {pipeline_mode = #tpu.pipeline_mode<synchronous>, transform_indices = @transform_8, window_bounds = array<i64: 4, 16>}, {transform_indices = @transform_9, window_bounds = array<i64: 1, 16, 16, 16>}]} {
    %c0 = arith.constant 0 : index
    %c0_0 = arith.constant 0 : index
    %0 = vector.load %arg2[%c0, %c0_0] : memref<4x4xf32, #tpu.memory_space<vmem>>, vector<4x4xf32>
    %c0_1 = arith.constant 0 : index
    %c0_2 = arith.constant 0 : index
    %1 = vector.load %arg3[%c0_1, %c0_2] : memref<1x4xf32, #tpu.memory_space<vmem>>, vector<1x4xf32>
    %c0_3 = arith.constant 0 : index
    %c0_4 = arith.constant 0 : index
    %2 = vector.load %arg4[%c0_3, %c0_4] : memref<1x4xf32, #tpu.memory_space<vmem>>, vector<1x4xf32>
    %c0_5 = arith.constant 0 : index
    %c0_6 = arith.constant 0 : index
    %3 = vector.load %arg5[%c0_5, %c0_6] : memref<36x4xf32, #tpu.memory_space<vmem>>, vector<36x4xf32>
    %c0_7 = arith.constant 0 : index
    %c0_8 = arith.constant 0 : index
    %4 = vector.load %arg6[%c0_7, %c0_8] : memref<1x4xf32, #tpu.memory_space<vmem>>, vector<1x4xf32>
    %c0_9 = arith.constant 0 : index
    %c0_10 = arith.constant 0 : index
    %5 = vector.load %arg7[%c0_9, %c0_10] : memref<1x4xf32, #tpu.memory_space<vmem>>, vector<1x4xf32>
    %c0_11 = arith.constant 0 : index
    %c0_12 = arith.constant 0 : index
    %6 = vector.load %arg8[%c0_11, %c0_12] : memref<4x16xf32, #tpu.memory_space<vmem>>, vector<4x16xf32>
    %c0_13 = arith.constant 0 : index
    %c0_14 = arith.constant 0 : index
    %7 = vector.load %arg9[%c0_13, %c0_14] : memref<4x16xf32, #tpu.memory_space<vmem>>, vector<4x16xf32>
    %cst = arith.constant 0.000000e+00 : f32
    %8 = vector.broadcast %cst : f32 to vector<1x18x4xf32>
    %cst_15 = arith.constant 0.000000e+00 : f32
    %9 = vector.broadcast %cst_15 : f32 to vector<18x1x4xf32>
    %c0_16 = arith.constant 0 : index
    %c0_17 = arith.constant 0 : index
    %c0_18 = arith.constant 0 : index
    %10 = vector.load %arg11[%c0_16, %c0_17, %c0_18] : memref<18x18x4xf32, #tpu.memory_space<vmem>>, vector<1x18x4xf32>
    tpu.vector_store %arg11[%c0_16, %c0_17, %c0_18], %8 {strides = array<i32>} : memref<18x18x4xf32, #tpu.memory_space<vmem>>, vector<1x18x4xf32>,
    %c17 = arith.constant 17 : index
    %c0_19 = arith.constant 0 : index
    %c0_20 = arith.constant 0 : index
    %11 = vector.load %arg11[%c17, %c0_19, %c0_20] : memref<18x18x4xf32, #tpu.memory_space<vmem>>, vector<1x18x4xf32>
    tpu.vector_store %arg11[%c17, %c0_19, %c0_20], %8 {strides = array<i32>} : memref<18x18x4xf32, #tpu.memory_space<vmem>>, vector<1x18x4xf32>,
    %c0_21 = arith.constant 0 : index
    %c0_22 = arith.constant 0 : index
    %c0_23 = arith.constant 0 : index
    %12 = vector.load %arg11[%c0_21, %c0_22, %c0_23] : memref<18x18x4xf32, #tpu.memory_space<vmem>>, vector<18x1x4xf32>
    tpu.vector_store %arg11[%c0_21, %c0_22, %c0_23], %9 {strides = array<i32>} : memref<18x18x4xf32, #tpu.memory_space<vmem>>, vector<18x1x4xf32>,
    %c0_24 = arith.constant 0 : index
    %c17_25 = arith.constant 17 : index
    %c0_26 = arith.constant 0 : index
    %13 = vector.load %arg11[%c0_24, %c17_25, %c0_26] : memref<18x18x4xf32, #tpu.memory_space<vmem>>, vector<18x1x4xf32>
    tpu.vector_store %arg11[%c0_24, %c17_25, %c0_26], %9 {strides = array<i32>} : memref<18x18x4xf32, #tpu.memory_space<vmem>>, vector<18x1x4xf32>,
    %c0_27 = arith.constant 0 : index
    %c0_28 = arith.constant 0 : index
    %c0_29 = arith.constant 0 : index
    %c0_30 = arith.constant 0 : index
    %14 = vector.load %arg1[%c0_27, %c0_28, %c0_29, %c0_30] : memref<1x16x16x4xf32, #tpu.memory_space<vmem>>, vector<1x16x16x4xf32>
    %15 = vector.shape_cast %14 : vector<1x16x16x4xf32> to vector<16x16x4xf32>
    %16 = vector.shape_cast %15 : vector<16x16x4xf32> to vector<256x4xf32>
    %cst_31 = arith.constant dense<0.000000e+00> : vector<256x4xf32>
    %17 = tpu.matmul %16, %0, %cst_31 {dimension_numbers = #tpu.dot_dimension_numbers<[1], [0], [0], [1], [0, 0, 1, 1], [], []>} : vector<256x4xf32>, vector<4x4xf32>, vector<256x4xf32> -> vector<256x4xf32>
    %18 = vector.broadcast %1 : vector<1x4xf32> to vector<256x4xf32>
    %19 = arith.mulf %17, %18 : vector<256x4xf32>
    %20 = vector.broadcast %2 : vector<1x4xf32> to vector<256x4xf32>
    %21 = arith.addf %19, %20 : vector<256x4xf32>
    %cst_32 = arith.constant 0.000000e+00 : f32
    %22 = vector.broadcast %cst_32 : f32 to vector<256x4xf32>
    %23 = arith.maximumf %21, %22 : vector<256x4xf32>
    %24 = vector.shape_cast %23 : vector<256x4xf32> to vector<16x16x4xf32>
    %c1 = arith.constant 1 : index
    %c1_33 = arith.constant 1 : index
    %c0_34 = arith.constant 0 : index
    %25 = vector.load %arg11[%c1, %c1_33, %c0_34] : memref<18x18x4xf32, #tpu.memory_space<vmem>>, vector<16x16x4xf32>
    tpu.vector_store %arg11[%c1, %c1_33, %c0_34], %24 {strides = array<i32>} : memref<18x18x4xf32, #tpu.memory_space<vmem>>, vector<16x16x4xf32>,
    %c0_35 = arith.constant 0 : index
    %c0_36 = arith.constant 0 : index
    %c0_37 = arith.constant 0 : index
    %26 = vector.load %arg11[%c0_35, %c0_36, %c0_37] : memref<18x18x4xf32, #tpu.memory_space<vmem>>, vector<8x16x4xf32>
    %27 = vector.shape_cast %26 : vector<8x16x4xf32> to vector<128x4xf32>
    %c0_38 = arith.constant 0 : index
    %c1_39 = arith.constant 1 : index
    %c0_40 = arith.constant 0 : index
    %28 = vector.load %arg11[%c0_38, %c1_39, %c0_40] : memref<18x18x4xf32, #tpu.memory_space<vmem>>, vector<8x16x4xf32>
    %29 = vector.shape_cast %28 : vector<8x16x4xf32> to vector<128x4xf32>
    %c0_41 = arith.constant 0 : index
    %c2 = arith.constant 2 : index
    %c0_42 = arith.constant 0 : index
    %30 = vector.load %arg11[%c0_41, %c2, %c0_42] : memref<18x18x4xf32, #tpu.memory_space<vmem>>, vector<8x16x4xf32>
    %31 = vector.shape_cast %30 : vector<8x16x4xf32> to vector<128x4xf32>
    %c1_43 = arith.constant 1 : index
    %c0_44 = arith.constant 0 : index
    %c0_45 = arith.constant 0 : index
    %32 = vector.load %arg11[%c1_43, %c0_44, %c0_45] : memref<18x18x4xf32, #tpu.memory_space<vmem>>, vector<8x16x4xf32>
    %33 = vector.shape_cast %32 : vector<8x16x4xf32> to vector<128x4xf32>
    %c1_46 = arith.constant 1 : index
    %c1_47 = arith.constant 1 : index
    %c0_48 = arith.constant 0 : index
    %34 = vector.load %arg11[%c1_46, %c1_47, %c0_48] : memref<18x18x4xf32, #tpu.memory_space<vmem>>, vector<8x16x4xf32>
    %35 = vector.shape_cast %34 : vector<8x16x4xf32> to vector<128x4xf32>
    %c1_49 = arith.constant 1 : index
    %c2_50 = arith.constant 2 : index
    %c0_51 = arith.constant 0 : index
    %36 = vector.load %arg11[%c1_49, %c2_50, %c0_51] : memref<18x18x4xf32, #tpu.memory_space<vmem>>, vector<8x16x4xf32>
    %37 = vector.shape_cast %36 : vector<8x16x4xf32> to vector<128x4xf32>
    %c2_52 = arith.constant 2 : index
    %c0_53 = arith.constant 0 : index
    %c0_54 = arith.constant 0 : index
    %38 = vector.load %arg11[%c2_52, %c0_53, %c0_54] : memref<18x18x4xf32, #tpu.memory_space<vmem>>, vector<8x16x4xf32>
    %39 = vector.shape_cast %38 : vector<8x16x4xf32> to vector<128x4xf32>
    %c2_55 = arith.constant 2 : index
    %c1_56 = arith.constant 1 : index
    %c0_57 = arith.constant 0 : index
    %40 = vector.load %arg11[%c2_55, %c1_56, %c0_57] : memref<18x18x4xf32, #tpu.memory_space<vmem>>, vector<8x16x4xf32>
    %41 = vector.shape_cast %40 : vector<8x16x4xf32> to vector<128x4xf32>
    %c2_58 = arith.constant 2 : index
    %c2_59 = arith.constant 2 : index
    %c0_60 = arith.constant 0 : index
    %42 = vector.load %arg11[%c2_58, %c2_59, %c0_60] : memref<18x18x4xf32, #tpu.memory_space<vmem>>, vector<8x16x4xf32>
    %43 = vector.shape_cast %42 : vector<8x16x4xf32> to vector<128x4xf32>
    %44 = tpu.concatenate %27, %29, %31, %33, %35, %37, %39, %41, %43 in 1 : vector<128x4xf32>, vector<128x4xf32>, vector<128x4xf32>, vector<128x4xf32>, vector<128x4xf32>, vector<128x4xf32>, vector<128x4xf32>, vector<128x4xf32>, vector<128x4xf32> -> vector<128x36xf32>
    %cst_61 = arith.constant dense<0.000000e+00> : vector<128x4xf32>
    %45 = tpu.matmul %44, %3, %cst_61 {dimension_numbers = #tpu.dot_dimension_numbers<[1], [0], [0], [1], [0, 0, 1, 1], [], []>} : vector<128x36xf32>, vector<36x4xf32>, vector<128x4xf32> -> vector<128x4xf32>
    %46 = vector.broadcast %4 : vector<1x4xf32> to vector<128x4xf32>
    %47 = arith.mulf %45, %46 : vector<128x4xf32>
    %48 = vector.broadcast %5 : vector<1x4xf32> to vector<128x4xf32>
    %49 = arith.addf %47, %48 : vector<128x4xf32>
    %cst_62 = arith.constant 0.000000e+00 : f32
    %50 = vector.broadcast %cst_62 : f32 to vector<128x4xf32>
    %51 = arith.maximumf %49, %50 : vector<128x4xf32>
    %cst_63 = arith.constant dense<0.000000e+00> : vector<128x16xf32>
    %52 = tpu.matmul %51, %6, %cst_63 {dimension_numbers = #tpu.dot_dimension_numbers<[1], [0], [0], [1], [0, 0, 1, 1], [], []>} : vector<128x4xf32>, vector<4x16xf32>, vector<128x16xf32> -> vector<128x16xf32>
    %c0_64 = arith.constant 0 : index
    %c0_65 = arith.constant 0 : index
    %c0_66 = arith.constant 0 : index
    %c0_67 = arith.constant 0 : index
    %53 = vector.load %arg1[%c0_64, %c0_65, %c0_66, %c0_67] : memref<1x16x16x4xf32, #tpu.memory_space<vmem>>, vector<1x8x16x4xf32>
    %54 = vector.shape_cast %53 : vector<1x8x16x4xf32> to vector<8x16x4xf32>
    %55 = vector.shape_cast %54 : vector<8x16x4xf32> to vector<128x4xf32>
    %cst_68 = arith.constant dense<0.000000e+00> : vector<128x16xf32>
    %56 = tpu.matmul %55, %7, %cst_68 {dimension_numbers = #tpu.dot_dimension_numbers<[1], [0], [0], [1], [0, 0, 1, 1], [], []>} : vector<128x4xf32>, vector<4x16xf32>, vector<128x16xf32> -> vector<128x16xf32>
    %57 = arith.addf %52, %56 : vector<128x16xf32>
    %58 = vector.shape_cast %57 : vector<128x16xf32> to vector<8x16x16xf32>
    %c0_69 = arith.constant 0 : index
    %c0_70 = arith.constant 0 : index
    %c0_71 = arith.constant 0 : index
    %c0_72 = arith.constant 0 : index
    %59 = vector.load %arg10[%c0_69, %c0_70, %c0_71, %c0_72] : memref<1x16x16x16xf32, #tpu.memory_space<vmem>>, vector<1x8x16x16xf32>
    %60 = vector.shape_cast %59 : vector<1x8x16x16xf32> to vector<8x16x16xf32>
    %61 = vector.shape_cast %58 : vector<8x16x16xf32> to vector<1x8x16x16xf32>
    tpu.vector_store %arg10[%c0_69, %c0_70, %c0_71, %c0_72], %61 {strides = array<i32>} : memref<1x16x16x16xf32, #tpu.memory_space<vmem>>, vector<1x8x16x16xf32>,
    %c8 = arith.constant 8 : index
    %c0_73 = arith.constant 0 : index
    %c0_74 = arith.constant 0 : index
    %62 = vector.load %arg11[%c8, %c0_73, %c0_74] : memref<18x18x4xf32, #tpu.memory_space<vmem>>, vector<8x16x4xf32>
    %63 = vector.shape_cast %62 : vector<8x16x4xf32> to vector<128x4xf32>
    %c8_75 = arith.constant 8 : index
    %c1_76 = arith.constant 1 : index
    %c0_77 = arith.constant 0 : index
    %64 = vector.load %arg11[%c8_75, %c1_76, %c0_77] : memref<18x18x4xf32, #tpu.memory_space<vmem>>, vector<8x16x4xf32>
    %65 = vector.shape_cast %64 : vector<8x16x4xf32> to vector<128x4xf32>
    %c8_78 = arith.constant 8 : index
    %c2_79 = arith.constant 2 : index
    %c0_80 = arith.constant 0 : index
    %66 = vector.load %arg11[%c8_78, %c2_79, %c0_80] : memref<18x18x4xf32, #tpu.memory_space<vmem>>, vector<8x16x4xf32>
    %67 = vector.shape_cast %66 : vector<8x16x4xf32> to vector<128x4xf32>
    %c9 = arith.constant 9 : index
    %c0_81 = arith.constant 0 : index
    %c0_82 = arith.constant 0 : index
    %68 = vector.load %arg11[%c9, %c0_81, %c0_82] : memref<18x18x4xf32, #tpu.memory_space<vmem>>, vector<8x16x4xf32>
    %69 = vector.shape_cast %68 : vector<8x16x4xf32> to vector<128x4xf32>
    %c9_83 = arith.constant 9 : index
    %c1_84 = arith.constant 1 : index
    %c0_85 = arith.constant 0 : index
    %70 = vector.load %arg11[%c9_83, %c1_84, %c0_85] : memref<18x18x4xf32, #tpu.memory_space<vmem>>, vector<8x16x4xf32>
    %71 = vector.shape_cast %70 : vector<8x16x4xf32> to vector<128x4xf32>
    %c9_86 = arith.constant 9 : index
    %c2_87 = arith.constant 2 : index
    %c0_88 = arith.constant 0 : index
    %72 = vector.load %arg11[%c9_86, %c2_87, %c0_88] : memref<18x18x4xf32, #tpu.memory_space<vmem>>, vector<8x16x4xf32>
    %73 = vector.shape_cast %72 : vector<8x16x4xf32> to vector<128x4xf32>
    %c10 = arith.constant 10 : index
    %c0_89 = arith.constant 0 : index
    %c0_90 = arith.constant 0 : index
    %74 = vector.load %arg11[%c10, %c0_89, %c0_90] : memref<18x18x4xf32, #tpu.memory_space<vmem>>, vector<8x16x4xf32>
    %75 = vector.shape_cast %74 : vector<8x16x4xf32> to vector<128x4xf32>
    %c10_91 = arith.constant 10 : index
    %c1_92 = arith.constant 1 : index
    %c0_93 = arith.constant 0 : index
    %76 = vector.load %arg11[%c10_91, %c1_92, %c0_93] : memref<18x18x4xf32, #tpu.memory_space<vmem>>, vector<8x16x4xf32>
    %77 = vector.shape_cast %76 : vector<8x16x4xf32> to vector<128x4xf32>
    %c10_94 = arith.constant 10 : index
    %c2_95 = arith.constant 2 : index
    %c0_96 = arith.constant 0 : index
    %78 = vector.load %arg11[%c10_94, %c2_95, %c0_96] : memref<18x18x4xf32, #tpu.memory_space<vmem>>, vector<8x16x4xf32>
    %79 = vector.shape_cast %78 : vector<8x16x4xf32> to vector<128x4xf32>
    %80 = tpu.concatenate %63, %65, %67, %69, %71, %73, %75, %77, %79 in 1 : vector<128x4xf32>, vector<128x4xf32>, vector<128x4xf32>, vector<128x4xf32>, vector<128x4xf32>, vector<128x4xf32>, vector<128x4xf32>, vector<128x4xf32>, vector<128x4xf32> -> vector<128x36xf32>
    %cst_97 = arith.constant dense<0.000000e+00> : vector<128x4xf32>
    %81 = tpu.matmul %80, %3, %cst_97 {dimension_numbers = #tpu.dot_dimension_numbers<[1], [0], [0], [1], [0, 0, 1, 1], [], []>} : vector<128x36xf32>, vector<36x4xf32>, vector<128x4xf32> -> vector<128x4xf32>
    %82 = vector.broadcast %4 : vector<1x4xf32> to vector<128x4xf32>
    %83 = arith.mulf %81, %82 : vector<128x4xf32>
    %84 = vector.broadcast %5 : vector<1x4xf32> to vector<128x4xf32>
    %85 = arith.addf %83, %84 : vector<128x4xf32>
    %cst_98 = arith.constant 0.000000e+00 : f32
    %86 = vector.broadcast %cst_98 : f32 to vector<128x4xf32>
    %87 = arith.maximumf %85, %86 : vector<128x4xf32>
    %cst_99 = arith.constant dense<0.000000e+00> : vector<128x16xf32>
    %88 = tpu.matmul %87, %6, %cst_99 {dimension_numbers = #tpu.dot_dimension_numbers<[1], [0], [0], [1], [0, 0, 1, 1], [], []>} : vector<128x4xf32>, vector<4x16xf32>, vector<128x16xf32> -> vector<128x16xf32>
    %c0_100 = arith.constant 0 : index
    %c8_101 = arith.constant 8 : index
    %c0_102 = arith.constant 0 : index
    %c0_103 = arith.constant 0 : index
    %89 = vector.load %arg1[%c0_100, %c8_101, %c0_102, %c0_103] : memref<1x16x16x4xf32, #tpu.memory_space<vmem>>, vector<1x8x16x4xf32>
    %90 = vector.shape_cast %89 : vector<1x8x16x4xf32> to vector<8x16x4xf32>
    %91 = vector.shape_cast %90 : vector<8x16x4xf32> to vector<128x4xf32>
    %cst_104 = arith.constant dense<0.000000e+00> : vector<128x16xf32>
    %92 = tpu.matmul %91, %7, %cst_104 {dimension_numbers = #tpu.dot_dimension_numbers<[1], [0], [0], [1], [0, 0, 1, 1], [], []>} : vector<128x4xf32>, vector<4x16xf32>, vector<128x16xf32> -> vector<128x16xf32>
    %93 = arith.addf %88, %92 : vector<128x16xf32>
    %94 = vector.shape_cast %93 : vector<128x16xf32> to vector<8x16x16xf32>
    %c0_105 = arith.constant 0 : index
    %c8_106 = arith.constant 8 : index
    %c0_107 = arith.constant 0 : index
    %c0_108 = arith.constant 0 : index
    %95 = vector.load %arg10[%c0_105, %c8_106, %c0_107, %c0_108] : memref<1x16x16x16xf32, #tpu.memory_space<vmem>>, vector<1x8x16x16xf32>
    %96 = vector.shape_cast %95 : vector<1x8x16x16xf32> to vector<8x16x16xf32>
    %97 = vector.shape_cast %94 : vector<8x16x16xf32> to vector<1x8x16x16xf32>
    tpu.vector_store %arg10[%c0_105, %c8_106, %c0_107, %c0_108], %97 {strides = array<i32>} : memref<1x16x16x16xf32, #tpu.memory_space<vmem>>, vector<1x8x16x16xf32>,
    return
  }
  func.func @transform_0(%arg0: i32) -> (i32, i32, i32, i32) {
    %c0_i32 = arith.constant 0 : i32
    %c0_i32_0 = arith.constant 0 : i32
    %c0_i32_1 = arith.constant 0 : i32
    %c0_i32_2 = arith.constant 0 : i32
    return %arg0, %c0_i32, %c0_i32_0, %c0_i32_1 : i32, i32, i32, i32
  }
  func.func @transform_1(%arg0: i32) -> (i32, i32) {
    %c0_i32 = arith.constant 0 : i32
    %c0_i32_0 = arith.constant 0 : i32
    %c0_i32_1 = arith.constant 0 : i32
    return %c0_i32, %c0_i32_0 : i32, i32
  }
  func.func @transform_2(%arg0: i32) -> (i32, i32) {
    %c0_i32 = arith.constant 0 : i32
    %c0_i32_0 = arith.constant 0 : i32
    %c0_i32_1 = arith.constant 0 : i32
    return %c0_i32, %c0_i32_0 : i32, i32
  }
  func.func @transform_3(%arg0: i32) -> (i32, i32) {
    %c0_i32 = arith.constant 0 : i32
    %c0_i32_0 = arith.constant 0 : i32
    %c0_i32_1 = arith.constant 0 : i32
    return %c0_i32, %c0_i32_0 : i32, i32
  }
  func.func @transform_4(%arg0: i32) -> (i32, i32) {
    %c0_i32 = arith.constant 0 : i32
    %c0_i32_0 = arith.constant 0 : i32
    %c0_i32_1 = arith.constant 0 : i32
    return %c0_i32, %c0_i32_0 : i32, i32
  }
  func.func @transform_5(%arg0: i32) -> (i32, i32) {
    %c0_i32 = arith.constant 0 : i32
    %c0_i32_0 = arith.constant 0 : i32
    %c0_i32_1 = arith.constant 0 : i32
    return %c0_i32, %c0_i32_0 : i32, i32
  }
  func.func @transform_6(%arg0: i32) -> (i32, i32) {
    %c0_i32 = arith.constant 0 : i32
    %c0_i32_0 = arith.constant 0 : i32
    %c0_i32_1 = arith.constant 0 : i32
    return %c0_i32, %c0_i32_0 : i32, i32
  }
  func.func @transform_7(%arg0: i32) -> (i32, i32) {
    %c0_i32 = arith.constant 0 : i32
    %c0_i32_0 = arith.constant 0 : i32
    %c0_i32_1 = arith.constant 0 : i32
    return %c0_i32, %c0_i32_0 : i32, i32
  }
  func.func @transform_8(%arg0: i32) -> (i32, i32) {
    %c0_i32 = arith.constant 0 : i32
    %c0_i32_0 = arith.constant 0 : i32
    %c0_i32_1 = arith.constant 0 : i32
    return %c0_i32, %c0_i32_0 : i32, i32
  }
  func.func @transform_9(%arg0: i32) -> (i32, i32, i32, i32) {
    %c0_i32 = arith.constant 0 : i32
    %c0_i32_0 = arith.constant 0 : i32
    %c0_i32_1 = arith.constant 0 : i32
    %c0_i32_2 = arith.constant 0 : i32
    return %arg0, %c0_i32, %c0_i32_0, %c0_i32_1 : i32, i32, i32, i32
  }
}

</mosaic_0001>

<llo_original>
// kernel: tpu_custom_call.1
$region0: #{tpu_custom_call.1}
  #allocation0 [shape = 'u32[]', space=smem, size = 0x4, offset = 0x4, fixed_abs, tag = 'smem constant byte address 0x4 - core index']
  #allocation1 [shape = 'u32[72,128]{1,0:T(1,128)}', space=vmem, size = 0x9000, scoped, tag = 'internal scratch']
  #allocation2 [shape = 'f32[18,18,4]{2,1,0:T(8,128)}', space=vmem, size = 0x36000, scoped, tag = 'scratch operand']
  %s0 = inlined_call_operand.vmem [shape: f32[2,16,16,4], index: 0, kind: input, shape index: {}]
  %s1 = inlined_call_operand.vmem [shape: f32[4,4], index: 1, kind: input, shape index: {}]
  %s2 = inlined_call_operand.vmem [shape: f32[1,4], index: 2, kind: input, shape index: {}]
  %s3 = inlined_call_operand.vmem [shape: f32[1,4], index: 3, kind: input, shape index: {}]
  %s4 = inlined_call_operand.vmem [shape: f32[36,4], index: 4, kind: input, shape index: {}]
  %s5 = inlined_call_operand.vmem [shape: f32[1,4], index: 5, kind: input, shape index: {}]
  %s6 = inlined_call_operand.vmem [shape: f32[1,4], index: 6, kind: input, shape index: {}]
  %s7 = inlined_call_operand.vmem [shape: f32[4,16], index: 7, kind: input, shape index: {}]
  %s8 = inlined_call_operand.vmem [shape: f32[4,16], index: 8, kind: input, shape index: {}]
  %s9 = inlined_call_operand.hbm [shape: f32[2,16,16,16], index: 9, kind: output, shape index: {}]
  %s10 = sld [smem:[#allocation0]]
  $region69: #{tpu_custom_call.1} parent=0
    _
  %s12 = ssub.s32 1, %s10
  %s13 = scalar_select 0, %s12, %s10
  $region1: #{tpu_custom_call.1} parent=0
    #allocation3 [shape = 'u8[262144]{0}', space=vmem, size = 0x40000, scoped, tag = 'output window, operand 0']
    #allocation4 [shape = 's32[2]{0}', space=sflag, size = 0x8, scoped, tag = 'scoped memory for tpu_custom_call.1']
    %14 = vsyncpa [#allocation4], 0
    %s15 = scalar_lea.sflag [#allocation4], 1
    %16 = vsyncpa %s15, 0
    loop: start=0, step=1, limit=4
    $region2: #{tpu_custom_call.1} parent=1 // loop_pre_header
      _
    $region3: #{tpu_custom_call.1} parent=1 // loop_header
      %s18 = sphi 0, %s22
      %p19 = scmp.ge.s32.totalorder %s18, 4
      %s28 = sphi 0, %s30
      %s31 = sphi 0, %s28
      %s32 = sphi 0, %s31
      %s48 = sphi 0, %s32
      %s52 = sphi 0, %s52
      %s54 = sphi 0, %s52
      %s55 = sphi 0, %s54
      %s69 = sphi 0, %s55
      %s73 = sphi 0, %s73
      %s75 = sphi 0, %s73
      %s76 = sphi 0, %s75
      %s90 = sphi 0, %s76
      %s94 = sphi 0, %s94
      %s96 = sphi 0, %s94
      %s97 = sphi 0, %s96
      %s111 = sphi 0, %s97
      %s115 = sphi 0, %s115
      %s117 = sphi 0, %s115
      %s118 = sphi 0, %s117
      %s132 = sphi 0, %s118
      %s136 = sphi 0, %s136
      %s138 = sphi 0, %s136
      %s139 = sphi 0, %s138
      %s153 = sphi 0, %s139
      %s157 = sphi 0, %s157
      %s159 = sphi 0, %s157
      %s160 = sphi 0, %s159
      %s174 = sphi 0, %s160
      %s178 = sphi 0, %s178
      %s180 = sphi 0, %s178
      %s181 = sphi 0, %s180
      %s195 = sphi 0, %s181
      %s199 = sphi 0, %s199
      %s201 = sphi 0, %s199
      %s202 = sphi 0, %s201
      %s216 = sphi 0, %s202
      %s222 = sphi 0, %s224
      %s225 = sphi 0, %s222
      %s226 = sphi 0, %s225
      %s242 = sphi 0, %s226
    $region4: #{tpu_custom_call.1} parent=1 // loop_header_branch
      %21 = sbr.rel (%p19) target = $region8
    $region5: #{tpu_custom_call.1} parent=1 // loop_body
      %s23 = ssub.s32 %s18, 1
      %s24 = ssub.s32 %s18, 2
      %s25 = sadd.s32 %s18, 1
      %s26 = ssub.s32 %s18, %s25
      %p27 = scmp.eq.s32.totalorder %s26, 0
      %s29 = sadd.s32 %s28, 1
      %s30 = scalar_select %p27, %s28, %s29
      %p33 = pneg %p27
      %p34 = scmp.eq.s32.totalorder %s18, 1
      %p35 = por %p33, %p34
      %p36 = scmp.ne.s32.totalorder %s28, %s31
      %p37 = scmp.eq.s32.totalorder %s18, 0
      %p38 = por %p36, %p37
      %p39 = scmp.ne.s32.totalorder %s28, %s31
      %p40 = scmp.eq.s32.totalorder %s23, 1
      %p41 = por %p39, %p40
      %p42 = scmp.ne.s32.totalorder %s31, %s32
      %p43 = scmp.eq.s32.totalorder %s23, 0
      %p44 = por %p42, %p43
      %p45 = scmp.ne.s32.totalorder %s31, %s32
      %p46 = scmp.eq.s32.totalorder %s24, 1
      %p47 = por %p45, %p46
      %p49 = scmp.ne.s32.totalorder %s32, %s48
      %p50 = scmp.eq.s32.totalorder %s24, 0
      %p51 = por %p49, %p50
      %s53 = sadd.s32 %s52, 1
      %p56 = scmp.eq.s32.totalorder %s18, 1
      %p57 = scmp.ne.s32.totalorder %s52, %s54
      %p58 = scmp.eq.s32.totalorder %s18, 0
      %p59 = por %p57, %p58
      %p60 = scmp.ne.s32.totalorder %s52, %s54
      %p61 = scmp.eq.s32.totalorder %s23, 1
      %p62 = por %p60, %p61
      %p63 = scmp.ne.s32.totalorder %s54, %s55
      %p64 = scmp.eq.s32.totalorder %s23, 0
      %p65 = por %p63, %p64
      %p66 = scmp.ne.s32.totalorder %s54, %s55
      %p67 = scmp.eq.s32.totalorder %s24, 1
      %p68 = por %p66, %p67
      %p70 = scmp.ne.s32.totalorder %s55, %s69
      %p71 = scmp.eq.s32.totalorder %s24, 0
      %p72 = por %p70, %p71
      %s74 = sadd.s32 %s73, 1
      %p77 = scmp.eq.s32.totalorder %s18, 1
      %p78 = scmp.ne.s32.totalorder %s73, %s75
      %p79 = scmp.eq.s32.totalorder %s18, 0
      %p80 = por %p78, %p79
      %p81 = scmp.ne.s32.totalorder %s73, %s75
      %p82 = scmp.eq.s32.totalorder %s23, 1
      %p83 = por %p81, %p82
      %p84 = scmp.ne.s32.totalorder %s75, %s76
      %p85 = scmp.eq.s32.totalorder %s23, 0
      %p86 = por %p84, %p85
      %p87 = scmp.ne.s32.totalorder %s75, %s76
      %p88 = scmp.eq.s32.totalorder %s24, 1
      %p89 = por %p87, %p88
      %p91 = scmp.ne.s32.totalorder %s76, %s90
      %p92 = scmp.eq.s32.totalorder %s24, 0
      %p93 = por %p91, %p92
      %s95 = sadd.s32 %s94, 1
      %p98 = scmp.eq.s32.totalorder %s18, 1
      %p99 = scmp.ne.s32.totalorder %s94, %s96
      %p100 = scmp.eq.s32.totalorder %s18, 0
      %p101 = por %p99, %p100
      %p102 = scmp.ne.s32.totalorder %s94, %s96
      %p103 = scmp.eq.s32.totalorder %s23, 1
      %p104 = por %p102, %p103
      %p105 = scmp.ne.s32.totalorder %s96, %s97
      %p106 = scmp.eq.s32.totalorder %s23, 0
      %p107 = por %p105, %p106
      %p108 = scmp.ne.s32.totalorder %s96, %s97
      %p109 = scmp.eq.s32.totalorder %s24, 1
      %p110 = por %p108, %p109
      %p112 = scmp.ne.s32.totalorder %s97, %s111
      %p113 = scmp.eq.s32.totalorder %s24, 0
      %p114 = por %p112, %p113
      %s116 = sadd.s32 %s115, 1
      %p119 = scmp.eq.s32.totalorder %s18, 1
      %p120 = scmp.ne.s32.totalorder %s115, %s117
      %p121 = scmp.eq.s32.totalorder %s18, 0
      %p122 = por %p120, %p121
      %p123 = scmp.ne.s32.totalorder %s115, %s117
      %p124 = scmp.eq.s32.totalorder %s23, 1
      %p125 = por %p123, %p124
      %p126 = scmp.ne.s32.totalorder %s117, %s118
      %p127 = scmp.eq.s32.totalorder %s23, 0
      %p128 = por %p126, %p127
      %p129 = scmp.ne.s32.totalorder %s117, %s118
      %p130 = scmp.eq.s32.totalorder %s24, 1
      %p131 = por %p129, %p130
      %p133 = scmp.ne.s32.totalorder %s118, %s132
      %p134 = scmp.eq.s32.totalorder %s24, 0
      %p135 = por %p133, %p134
      %s137 = sadd.s32 %s136, 1
      %p140 = scmp.eq.s32.totalorder %s18, 1
      %p141 = scmp.ne.s32.totalorder %s136, %s138
      %p142 = scmp.eq.s32.totalorder %s18, 0
      %p143 = por %p141, %p142
      %p144 = scmp.ne.s32.totalorder %s136, %s138
      %p145 = scmp.eq.s32.totalorder %s23, 1
      %p146 = por %p144, %p145
      %p147 = scmp.ne.s32.totalorder %s138, %s139
      %p148 = scmp.eq.s32.totalorder %s23, 0
      %p149 = por %p147, %p148
      %p150 = scmp.ne.s32.totalorder %s138, %s139
      %p151 = scmp.eq.s32.totalorder %s24, 1
      %p152 = por %p150, %p151
      %p154 = scmp.ne.s32.totalorder %s139, %s153
      %p155 = scmp.eq.s32.totalorder %s24, 0
      %p156 = por %p154, %p155
      %s158 = sadd.s32 %s157, 1
      %p161 = scmp.eq.s32.totalorder %s18, 1
      %p162 = scmp.ne.s32.totalorder %s157, %s159
      %p163 = scmp.eq.s32.totalorder %s18, 0
      %p164 = por %p162, %p163
      %p165 = scmp.ne.s32.totalorder %s157, %s159
      %p166 = scmp.eq.s32.totalorder %s23, 1
      %p167 = por %p165, %p166
      %p168 = scmp.ne.s32.totalorder %s159, %s160
      %p169 = scmp.eq.s32.totalorder %s23, 0
      %p170 = por %p168, %p169
      %p171 = scmp.ne.s32.totalorder %s159, %s160
      %p172 = scmp.eq.s32.totalorder %s24, 1
      %p173 = por %p171, %p172
      %p175 = scmp.ne.s32.totalorder %s160, %s174
      %p176 = scmp.eq.s32.totalorder %s24, 0
      %p177 = por %p175, %p176
      %s179 = sadd.s32 %s178, 1
      %p182 = scmp.eq.s32.totalorder %s18, 1
      %p183 = scmp.ne.s32.totalorder %s178, %s180
      %p184 = scmp.eq.s32.totalorder %s18, 0
      %p185 = por %p183, %p184
      %p186 = scmp.ne.s32.totalorder %s178, %s180
      %p187 = scmp.eq.s32.totalorder %s23, 1
      %p188 = por %p186, %p187
      %p189 = scmp.ne.s32.totalorder %s180, %s181
      %p190 = scmp.eq.s32.totalorder %s23, 0
      %p191 = por %p189, %p190
      %p192 = scmp.ne.s32.totalorder %s180, %s181
      %p193 = scmp.eq.s32.totalorder %s24, 1
      %p194 = por %p192, %p193
      %p196 = scmp.ne.s32.totalorder %s181, %s195
      %p197 = scmp.eq.s32.totalorder %s24, 0
      %p198 = por %p196, %p197
      %s200 = sadd.s32 %s199, 1
      %p203 = scmp.eq.s32.totalorder %s18, 1
      %p204 = scmp.ne.s32.totalorder %s199, %s201
      %p205 = scmp.eq.s32.totalorder %s18, 0
      %p206 = por %p204, %p205
      %p207 = scmp.ne.s32.totalorder %s199, %s201
      %p208 = scmp.eq.s32.totalorder %s23, 1
      %p209 = por %p207, %p208
      %p210 = scmp.ne.s32.totalorder %s201, %s202
      %p211 = scmp.eq.s32.totalorder %s23, 0
      %p212 = por %p210, %p211
      %p213 = scmp.ne.s32.totalorder %s201, %s202
      %p214 = scmp.eq.s32.totalorder %s24, 1
      %p215 = por %p213, %p214
      %p217 = scmp.ne.s32.totalorder %s202, %s216
      %p218 = scmp.eq.s32.totalorder %s24, 0
      %p219 = por %p217, %p218
      %s220 = ssub.s32 %s18, %s25
      %p221 = scmp.eq.s32.totalorder %s220, 0
      %s223 = sadd.s32 %s222, 1
      %s224 = scalar_select %p221, %s222, %s223
      %p227 = pneg %p221
      %p228 = scmp.eq.s32.totalorder %s18, 1
      %p229 = por %p227, %p228
      %p230 = scmp.ne.s32.totalorder %s222, %s225
      %p231 = scmp.eq.s32.totalorder %s18, 0
      %p232 = por %p230, %p231
      %p233 = scmp.ne.s32.totalorder %s222, %s225
      %p234 = scmp.eq.s32.totalorder %s23, 1
      %p235 = por %p233, %p234
      %p236 = scmp.ne.s32.totalorder %s225, %s226
      %p237 = scmp.eq.s32.totalorder %s23, 0
      %p238 = por %p236, %p237
      %p239 = scmp.ne.s32.totalorder %s225, %s226
      %p240 = scmp.eq.s32.totalorder %s24, 1
      %p241 = por %p239, %p240
      %p243 = scmp.ne.s32.totalorder %s226, %s242
      %p244 = scmp.eq.s32.totalorder %s24, 0
      %p245 = por %p243, %p244
      %p246 = scmp.le.s32.totalorder 1, %s18
      %p247 = scmp.lt.s32.totalorder %s18, 3
      %p248 = pnand %p246, %p247
      %p249 = pneg %p248
      // Predicated region
      $region9: #{tpu_custom_call.1} parent=5 // pred_check
        _
      $region10: #{tpu_custom_call.1} parent=5 // pred_check_branch
        %251 = sbr.rel (%p248) target = $region12
      $region11: #{tpu_custom_call.1} parent=5 // pred_region
        %s252 = ssub.s32 %s18, 1
        // Predicated region
        $region13: #{tpu_custom_call.1} parent=11 // pred_check
          %p253 = pneg %p65
        $region14: #{tpu_custom_call.1} parent=11 // pred_check_branch
          %255 = sbr.rel (%p253) target = $region16
        $region15: #{tpu_custom_call.1} parent=11 // pred_region
          _
        $region16: #{tpu_custom_call.1} parent=11 // pred_fallthru
          _
        // Predicated region
        $region17: #{tpu_custom_call.1} parent=11 // pred_check
          %p256 = pneg %p86
        $region18: #{tpu_custom_call.1} parent=11 // pred_check_branch
          %258 = sbr.rel (%p256) target = $region20
        $region19: #{tpu_custom_call.1} parent=11 // pred_region
          _
        $region20: #{tpu_custom_call.1} parent=11 // pred_fallthru
          _
        // Predicated region
        $region21: #{tpu_custom_call.1} parent=11 // pred_check
          %p259 = pneg %p107
        $region22: #{tpu_custom_call.1} parent=11 // pred_check_branch
          %261 = sbr.rel (%p259) target = $region24
        $region23: #{tpu_custom_call.1} parent=11 // pred_region
          _
        $region24: #{tpu_custom_call.1} parent=11 // pred_fallthru
          _
        // Predicated region
        $region25: #{tpu_custom_call.1} parent=11 // pred_check
          %p262 = pneg %p128
        $region26: #{tpu_custom_call.1} parent=11 // pred_check_branch
          %264 = sbr.rel (%p262) target = $region28
        $region27: #{tpu_custom_call.1} parent=11 // pred_region
          _
        $region28: #{tpu_custom_call.1} parent=11 // pred_fallthru
          _
        // Predicated region
        $region29: #{tpu_custom_call.1} parent=11 // pred_check
          %p265 = pneg %p149
        $region30: #{tpu_custom_call.1} parent=11 // pred_check_branch
          %267 = sbr.rel (%p265) target = $region32
        $region31: #{tpu_custom_call.1} parent=11 // pred_region
          _
        $region32: #{tpu_custom_call.1} parent=11 // pred_fallthru
          _
        // Predicated region
        $region33: #{tpu_custom_call.1} parent=11 // pred_check
          %p268 = pneg %p170
        $region34: #{tpu_custom_call.1} parent=11 // pred_check_branch
          %270 = sbr.rel (%p268) target = $region36
        $region35: #{tpu_custom_call.1} parent=11 // pred_region
          _
        $region36: #{tpu_custom_call.1} parent=11 // pred_fallthru
          _
        // Predicated region
        $region37: #{tpu_custom_call.1} parent=11 // pred_check
          %p271 = pneg %p191
        $region38: #{tpu_custom_call.1} parent=11 // pred_check_branch
          %273 = sbr.rel (%p271) target = $region40
        $region39: #{tpu_custom_call.1} parent=11 // pred_region
          _
        $region40: #{tpu_custom_call.1} parent=11 // pred_fallthru
          _
        // Predicated region
        $region41: #{tpu_custom_call.1} parent=11 // pred_check
          %p274 = pneg %p212
        $region42: #{tpu_custom_call.1} parent=11 // pred_check_branch
          %276 = sbr.rel (%p274) target = $region44
        $region43: #{tpu_custom_call.1} parent=11 // pred_region
          _
        $region44: #{tpu_custom_call.1} parent=11 // pred_fallthru
          _
      $region12: #{tpu_custom_call.1} parent=5 // pred_fallthru
        _
      %p277 = scmp.lt.s32.totalorder %s18, 2
      // Predicated region
      $region45: #{tpu_custom_call.1} parent=5 // pred_check
        %p278 = pneg %p277
      $region46: #{tpu_custom_call.1} parent=5 // pred_check_branch
        %280 = sbr.rel (%p278) target = $region48
      $region47: #{tpu_custom_call.1} parent=5 // pred_region
        // Predicated region
        $region49: #{tpu_custom_call.1} parent=47 // pred_check
          %p281 = pneg %p38
        $region50: #{tpu_custom_call.1} parent=47 // pred_check_branch
          %283 = sbr.rel (%p281) target = $region52
        $region51: #{tpu_custom_call.1} parent=47 // pred_region
          %p284 = scmp.lt.s32.totalorder %s18, 1
          %s285 = scalar_select %p284, %s18, 1
          %s286 = smul.addr %s285, 32
          %s287 = smul.addr %s286, 8
          %s288 = scalar_lea.vmem %s0, %s287
        $region52: #{tpu_custom_call.1} parent=47 // pred_fallthru
          _
      $region48: #{tpu_custom_call.1} parent=5 // pred_fallthru
        _
      %p289 = scmp.le.s32.totalorder 1, %s18
      %p290 = scmp.lt.s32.totalorder %s18, 3
      %p291 = pnand %p289, %p290
      %p292 = pneg %p291
      // Predicated region
      $region53: #{tpu_custom_call.1} parent=5 // pred_check
        _
      $region54: #{tpu_custom_call.1} parent=5 // pred_check_branch
        %294 = sbr.rel (%p291) target = $region56
      $region55: #{tpu_custom_call.1} parent=5 // pred_region
        %s295 = ssub.s32 %s18, 1
        %p296 = scmp.lt.s32.totalorder %s23, 1
        %s297 = scalar_select %p296, %s23, 1
        %s298 = smul.addr %s297, 32
        %s299 = smul.addr %s298, 8
        %s300 = scalar_lea.vmem %s0, %s299
        %p301 = pneg %p44
        %p302 = pneg %p41
        %p303 = pneg %p65
        %p304 = pneg %p62
        %p305 = pneg %p86
        %p306 = pneg %p83
        %p307 = pneg %p107
        %p308 = pneg %p104
        %p309 = pneg %p128
        %p310 = pneg %p125
        %p311 = pneg %p149
        %p312 = pneg %p146
        %p313 = pneg %p170
        %p314 = pneg %p167
        %p315 = pneg %p191
        %p316 = pneg %p188
        %p317 = pneg %p212
        %p318 = pneg %p209
        %p319 = pneg %p238
        %p320 = pneg %p235
        %s321 = sand.u32 %s225, 1
        %s322 = scalar_lea.sflag [#allocation4], %s321
        %s323 = sand.u32 %s225, 1
        %s324 = smul.addr %s323, 256
        %s325 = scalar_lea.vmem [#allocation3], %s324
        %p326 = scmp.lt.s32.totalorder %s23, 1
        %s327 = scalar_select %p326, %s23, 1
        %s328 = smul.addr %s327, 32
        %s329 = smul.addr %s328, 8
        %s330 = scalar_lea.vmem %s0, %s329
        %v331 = vld [vmem:[%s1] sm:$0xf]
        %v332 = vld [vmem:[%s2] sm:$0x1]
        %v333 = vld [vmem:[%s3] sm:$0x1]
        %v334 = vld [vmem:[%s4] sm:$0xff]
        %v335 = vld [vmem:[%s4 + $0x8] sm:$0xff]
        %v336 = vld [vmem:[%s4 + $0x10] sm:$0xff]
        %v337 = vld [vmem:[%s4 + $0x18] sm:$0xff]
        %v338 = vld [vmem:[%s4 + $0x20] sm:$0xf]
        %v339 = vld [vmem:[%s5] sm:$0x1]
        %v340 = vld [vmem:[%s6] sm:$0x1]
        %v341 = vld [vmem:[%s7] sm:$0xf]
        %v342 = vld [vmem:[%s8] sm:$0xf]
        %vm343 = vcmask 31744
        %344 = vst.msk [vmem:[#allocation2] sm:$0xff] %vm343, 0.0
        %345 = vst.msk [vmem:[#allocation2 + $0x8] sm:$0xff] %vm343, 0.0
        %vm346 = vcmask 25600
        %347 = vst.msk [vmem:[#allocation2 + $0x10] sm:$0x3] %vm346, 0.0
        %s348 = scalar_lea.vmem [#allocation2], 408
        %349 = vst.msk [vmem:[%s348] sm:$0xff] %vm343, 0.0
        %350 = vst.msk [vmem:[%s348 + $0x8] sm:$0xff] %vm343, 0.0
        %351 = vst.msk [vmem:[%s348 + $0x10] sm:$0x3] %vm346, 0.0
        %vm352 = vcmask 24576
        %353 = vst.msk [vmem:[#allocation2] sm:$0x1] %vm352, 0.0
        %354 = vst.msk [vmem:[#allocation2 + $0x18] sm:$0x1] %vm352, 0.0
        %355 = vst.msk [vmem:[#allocation2 + $0x30] sm:$0x1] %vm352, 0.0
        %356 = vst.msk [vmem:[#allocation2 + $0x48] sm:$0x1] %vm352, 0.0
        %357 = vst.msk [vmem:[#allocation2 + $0x60] sm:$0x1] %vm352, 0.0
        %358 = vst.msk [vmem:[#allocation2 + $0x78] sm:$0x1] %vm352, 0.0
        %359 = vst.msk [vmem:[#allocation2 + $0x90] sm:$0x1] %vm352, 0.0
        %360 = vst.msk [vmem:[#allocation2 + $0xa8] sm:$0x1] %vm352, 0.0
        %361 = vst.msk [vmem:[#allocation2 + $0xc0] sm:$0x1] %vm352, 0.0
        %362 = vst.msk [vmem:[#allocation2 + $0xd8] sm:$0x1] %vm352, 0.0
        %363 = vst.msk [vmem:[#allocation2 + $0xf0] sm:$0x1] %vm352, 0.0
        %364 = vst.msk [vmem:[#allocation2 + $0x108] sm:$0x1] %vm352, 0.0
        %365 = vst.msk [vmem:[#allocation2 + $0x120] sm:$0x1] %vm352, 0.0
        %366 = vst.msk [vmem:[#allocation2 + $0x138] sm:$0x1] %vm352, 0.0
        %367 = vst.msk [vmem:[#allocation2 + $0x150] sm:$0x1] %vm352, 0.0
        %368 = vst.msk [vmem:[#allocation2 + $0x168] sm:$0x1] %vm352, 0.0
        %369 = vst.msk [vmem:[#allocation2 + $0x180] sm:$0x1] %vm352, 0.0
        %370 = vst.msk [vmem:[#allocation2 + $0x198] sm:$0x1] %vm352, 0.0
        %371 = vst.msk [vmem:[#allocation2 + $0x11] sm:$0x1] %vm352, 0.0
        %372 = vst.msk [vmem:[#allocation2 + $0x29] sm:$0x1] %vm352, 0.0
        %373 = vst.msk [vmem:[#allocation2 + $0x41] sm:$0x1] %vm352, 0.0
        %374 = vst.msk [vmem:[#allocation2 + $0x59] sm:$0x1] %vm352, 0.0
        %375 = vst.msk [vmem:[#allocation2 + $0x71] sm:$0x1] %vm352, 0.0
        %376 = vst.msk [vmem:[#allocation2 + $0x89] sm:$0x1] %vm352, 0.0
        %377 = vst.msk [vmem:[#allocation2 + $0xa1] sm:$0x1] %vm352, 0.0
        %378 = vst.msk [vmem:[#allocation2 + $0xb9] sm:$0x1] %vm352, 0.0
        %379 = vst.msk [vmem:[#allocation2 + $0xd1] sm:$0x1] %vm352, 0.0
        %380 = vst.msk [vmem:[#allocation2 + $0xe9] sm:$0x1] %vm352, 0.0
        %381 = vst.msk [vmem:[#allocation2 + $0x101] sm:$0x1] %vm352, 0.0
        %382 = vst.msk [vmem:[#allocation2 + $0x119] sm:$0x1] %vm352, 0.0
        %383 = vst.msk [vmem:[#allocation2 + $0x131] sm:$0x1] %vm352, 0.0
        %384 = vst.msk [vmem:[#allocation2 + $0x149] sm:$0x1] %vm352, 0.0
        %385 = vst.msk [vmem:[#allocation2 + $0x161] sm:$0x1] %vm352, 0.0
        %386 = vst.msk [vmem:[#allocation2 + $0x179] sm:$0x1] %vm352, 0.0
        %387 = vst.msk [vmem:[#allocation2 + $0x191] sm:$0x1] %vm352, 0.0
        %388 = vst.msk [vmem:[#allocation2 + $0x1a9] sm:$0x1] %vm352, 0.0
        %v389 = vld [vmem:[%s330] sm:$0xff]
        %v390 = vld [vmem:[%s330 + $0x8] sm:$0xff]
        %v391 = vld [vmem:[%s330 + $0x10] sm:$0xff]
        %v392 = vld [vmem:[%s330 + $0x18] sm:$0xff]
        %v393 = vld [vmem:[%s330 + $0x20] sm:$0xff]
        %v394 = vld [vmem:[%s330 + $0x28] sm:$0xff]
        %v395 = vld [vmem:[%s330 + $0x30] sm:$0xff]
        %v396 = vld [vmem:[%s330 + $0x38] sm:$0xff]
        %v397 = vld [vmem:[%s330 + $0x40] sm:$0xff]
        %v398 = vld [vmem:[%s330 + $0x48] sm:$0xff]
        %v399 = vld [vmem:[%s330 + $0x50] sm:$0xff]
        %v400 = vld [vmem:[%s330 + $0x58] sm:$0xff]
        %v401 = vld [vmem:[%s330 + $0x60] sm:$0xff]
        %v402 = vld [vmem:[%s330 + $0x68] sm:$0xff]
        %v403 = vld [vmem:[%s330 + $0x70] sm:$0xff]
        %v404 = vld [vmem:[%s330 + $0x78] sm:$0xff]
        %v405 = vld [vmem:[%s330 + $0x80] sm:$0xff]
        %v406 = vld [vmem:[%s330 + $0x88] sm:$0xff]
        %v407 = vld [vmem:[%s330 + $0x90] sm:$0xff]
        %v408 = vld [vmem:[%s330 + $0x98] sm:$0xff]
        %v409 = vld [vmem:[%s330 + $0xa0] sm:$0xff]
        %v410 = vld [vmem:[%s330 + $0xa8] sm:$0xff]
        %v411 = vld [vmem:[%s330 + $0xb0] sm:$0xff]
        %v412 = vld [vmem:[%s330 + $0xb8] sm:$0xff]
        %v413 = vld [vmem:[%s330 + $0xc0] sm:$0xff]
        %v414 = vld [vmem:[%s330 + $0xc8] sm:$0xff]
        %v415 = vld [vmem:[%s330 + $0xd0] sm:$0xff]
        %v416 = vld [vmem:[%s330 + $0xd8] sm:$0xff]
        %v417 = vld [vmem:[%s330 + $0xe0] sm:$0xff]
        %v418 = vld [vmem:[%s330 + $0xe8] sm:$0xff]
        %v419 = vld [vmem:[%s330 + $0xf0] sm:$0xff]
        %v420 = vld [vmem:[%s330 + $0xf8] sm:$0xff]
        %v422 = vsel %vm343, %v389, 0
        %v425 = vsel %vm343, %v390, 0
        %v428 = vsel %vm343, %v391, 0
        %v431 = vsel %vm343, %v392, 0
        %v434 = vsel %vm343, %v393, 0
        %v437 = vsel %vm343, %v394, 0
        %v440 = vsel %vm343, %v395, 0
        %v443 = vsel %vm343, %v396, 0
        %v446 = vsel %vm343, %v397, 0
        %v449 = vsel %vm343, %v398, 0
        %v452 = vsel %vm343, %v399, 0
        %v455 = vsel %vm343, %v400, 0
        %v458 = vsel %vm343, %v401, 0
        %v461 = vsel %vm343, %v402, 0
        %v464 = vsel %vm343, %v403, 0
        %v467 = vsel %vm343, %v404, 0
        %v470 = vsel %vm343, %v405, 0
        %v473 = vsel %vm343, %v406, 0
        %v476 = vsel %vm343, %v407, 0
        %v479 = vsel %vm343, %v408, 0
        %v482 = vsel %vm343, %v409, 0
        %v485 = vsel %vm343, %v410, 0
        %v488 = vsel %vm343, %v411, 0
        %v491 = vsel %vm343, %v412, 0
        %v494 = vsel %vm343, %v413, 0
        %v497 = vsel %vm343, %v414, 0
        %v500 = vsel %vm343, %v415, 0
        %v503 = vsel %vm343, %v416, 0
        %v506 = vsel %vm343, %v417, 0
        %v509 = vsel %vm343, %v418, 0
        %v512 = vsel %vm343, %v419, 0
        %v515 = vsel %vm343, %v420, 0
        %vm517 = vcmask 1043456
        %v519 = vsel %vm517, %v331, 0
        %521 = vmatpush.msra.mxu0 0.0
        %522 = vmatpush.msra.mxu0 0.0
        %523 = vmatpush.msra.mxu0 0.0
        %524 = vmatpush.msra.mxu0 0.0
        %525 = vmatpush.msra.mxu0 0.0
        %526 = vmatpush.msra.mxu0 0.0
        %527 = vmatpush.msra.mxu0 0.0
        %528 = vmatpush.msra.mxu0 0.0
        %529 = vmatpush.msra.mxu0 0.0
        %530 = vmatpush.msra.mxu0 0.0
        %531 = vmatpush.msra.mxu0 0.0
        %532 = vmatpush.msra.mxu0 0.0
        %533 = vmatpush.msra.mxu0 0.0
        %534 = vmatpush.msra.mxu0 0.0
        %535 = vmatpush.msra.mxu0 0.0
        %536 = vmatpush.msra.mxu0 %v519
        %537 = vmatmul.f32.gmra.mxu0 %v422
        %v538 = vpop.f32.mrf.mxu0
        %v539 = vadd.f32 0.0, %v538
        %540 = vmatmul.f32.gmra.mxu0 %v425
        %v541 = vpop.f32.mrf.mxu0
        %v542 = vadd.f32 0.0, %v541
        %543 = vmatmul.f32.gmra.mxu0 %v428
        %v544 = vpop.f32.mrf.mxu0
        %v545 = vadd.f32 0.0, %v544
        %546 = vmatmul.f32.gmra.mxu0 %v431
        %v547 = vpop.f32.mrf.mxu0
        %v548 = vadd.f32 0.0, %v547
        %549 = vmatmul.f32.gmra.mxu0 %v434
        %v550 = vpop.f32.mrf.mxu0
        %v551 = vadd.f32 0.0, %v550
        %552 = vmatmul.f32.gmra.mxu0 %v437
        %v553 = vpop.f32.mrf.mxu0
        %v554 = vadd.f32 0.0, %v553
        %555 = vmatmul.f32.gmra.mxu0 %v440
        %v556 = vpop.f32.mrf.mxu0
        %v557 = vadd.f32 0.0, %v556
        %558 = vmatmul.f32.gmra.mxu0 %v443
        %v559 = vpop.f32.mrf.mxu0
        %v560 = vadd.f32 0.0, %v559
        %561 = vmatmul.f32.gmra.mxu0 %v446
        %v562 = vpop.f32.mrf.mxu0
        %v563 = vadd.f32 0.0, %v562
        %564 = vmatmul.f32.gmra.mxu0 %v449
        %v565 = vpop.f32.mrf.mxu0
        %v566 = vadd.f32 0.0, %v565
        %567 = vmatmul.f32.gmra.mxu0 %v452
        %v568 = vpop.f32.mrf.mxu0
        %v569 = vadd.f32 0.0, %v568
        %570 = vmatmul.f32.gmra.mxu0 %v455
        %v571 = vpop.f32.mrf.mxu0
        %v572 = vadd.f32 0.0, %v571
        %573 = vmatmul.f32.gmra.mxu0 %v458
        %v574 = vpop.f32.mrf.mxu0
        %v575 = vadd.f32 0.0, %v574
        %576 = vmatmul.f32.gmra.mxu0 %v461
        %v577 = vpop.f32.mrf.mxu0
        %v578 = vadd.f32 0.0, %v577
        %579 = vmatmul.f32.gmra.mxu0 %v464
        %v580 = vpop.f32.mrf.mxu0
        %v581 = vadd.f32 0.0, %v580
        %582 = vmatmul.f32.gmra.mxu0 %v467
        %v583 = vpop.f32.mrf.mxu0
        %v584 = vadd.f32 0.0, %v583
        %585 = vmatmul.f32.gmra.mxu0 %v470
        %v586 = vpop.f32.mrf.mxu0
        %v587 = vadd.f32 0.0, %v586
        %588 = vmatmul.f32.gmra.mxu0 %v473
        %v589 = vpop.f32.mrf.mxu0
        %v590 = vadd.f32 0.0, %v589
        %591 = vmatmul.f32.gmra.mxu0 %v476
        %v592 = vpop.f32.mrf.mxu0
        %v593 = vadd.f32 0.0, %v592
        %594 = vmatmul.f32.gmra.mxu0 %v479
        %v595 = vpop.f32.mrf.mxu0
        %v596 = vadd.f32 0.0, %v595
        %597 = vmatmul.f32.gmra.mxu0 %v482
        %v598 = vpop.f32.mrf.mxu0
        %v599 = vadd.f32 0.0, %v598
        %600 = vmatmul.f32.gmra.mxu0 %v485
        %v601 = vpop.f32.mrf.mxu0
        %v602 = vadd.f32 0.0, %v601
        %603 = vmatmul.f32.gmra.mxu0 %v488
        %v604 = vpop.f32.mrf.mxu0
        %v605 = vadd.f32 0.0, %v604
        %606 = vmatmul.f32.gmra.mxu0 %v491
        %v607 = vpop.f32.mrf.mxu0
        %v608 = vadd.f32 0.0, %v607
        %609 = vmatmul.f32.gmra.mxu0 %v494
        %v610 = vpop.f32.mrf.mxu0
        %v611 = vadd.f32 0.0, %v610
        %612 = vmatmul.f32.gmra.mxu0 %v497
        %v613 = vpop.f32.mrf.mxu0
        %v614 = vadd.f32 0.0, %v613
        %615 = vmatmul.f32.gmra.mxu0 %v500
        %v616 = vpop.f32.mrf.mxu0
        %v617 = vadd.f32 0.0, %v616
        %618 = vmatmul.f32.gmra.mxu0 %v503
        %v619 = vpop.f32.mrf.mxu0
        %v620 = vadd.f32 0.0, %v619
        %621 = vmatmul.f32.gmra.mxu0 %v506
        %v622 = vpop.f32.mrf.mxu0
        %v623 = vadd.f32 0.0, %v622
        %624 = vmatmul.f32.gmra.mxu0 %v509
        %v625 = vpop.f32.mrf.mxu0
        %v626 = vadd.f32 0.0, %v625
        %627 = vmatmul.f32.gmra.mxu0 %v512
        %v628 = vpop.f32.mrf.mxu0
        %v629 = vadd.f32 0.0, %v628
        %630 = vmatmul.f32.gmra.mxu0 %v515
        %v631 = vpop.f32.mrf.mxu0
        %v632 = vadd.f32 0.0, %v631
        %633 = vdwg.mxu0
        %v635 = vperm.slane %v332, 0
        %v637 = vmul.f32 %v539, %v635
        %v638 = vmul.f32 %v542, %v635
        %v639 = vmul.f32 %v545, %v635
        %v640 = vmul.f32 %v548, %v635
        %v641 = vmul.f32 %v551, %v635
        %v642 = vmul.f32 %v554, %v635
        %v643 = vmul.f32 %v557, %v635
        %v644 = vmul.f32 %v560, %v635
        %v645 = vmul.f32 %v563, %v635
        %v646 = vmul.f32 %v566, %v635
        %v647 = vmul.f32 %v569, %v635
        %v648 = vmul.f32 %v572, %v635
        %v649 = vmul.f32 %v575, %v635
        %v650 = vmul.f32 %v578, %v635
        %v651 = vmul.f32 %v581, %v635
        %v652 = vmul.f32 %v584, %v635
        %v653 = vmul.f32 %v587, %v635
        %v654 = vmul.f32 %v590, %v635
        %v655 = vmul.f32 %v593, %v635
        %v656 = vmul.f32 %v596, %v635
        %v657 = vmul.f32 %v599, %v635
        %v658 = vmul.f32 %v602, %v635
        %v659 = vmul.f32 %v605, %v635
        %v660 = vmul.f32 %v608, %v635
        %v661 = vmul.f32 %v611, %v635
        %v662 = vmul.f32 %v614, %v635
        %v663 = vmul.f32 %v617, %v635
        %v664 = vmul.f32 %v620, %v635
        %v665 = vmul.f32 %v623, %v635
        %v666 = vmul.f32 %v626, %v635
        %v667 = vmul.f32 %v629, %v635
        %v668 = vmul.f32 %v632, %v635
        %v670 = vperm.slane %v333, 0
        %v672 = vadd.f32 %v637, %v670
        %v673 = vadd.f32 %v638, %v670
        %v674 = vadd.f32 %v639, %v670
        %v675 = vadd.f32 %v640, %v670
        %v676 = vadd.f32 %v641, %v670
        %v677 = vadd.f32 %v642, %v670
        %v678 = vadd.f32 %v643, %v670
        %v679 = vadd.f32 %v644, %v670
        %v680 = vadd.f32 %v645, %v670
        %v681 = vadd.f32 %v646, %v670
        %v682 = vadd.f32 %v647, %v670
        %v683 = vadd.f32 %v648, %v670
        %v684 = vadd.f32 %v649, %v670
        %v685 = vadd.f32 %v650, %v670
        %v686 = vadd.f32 %v651, %v670
        %v687 = vadd.f32 %v652, %v670
        %v688 = vadd.f32 %v653, %v670
        %v689 = vadd.f32 %v654, %v670
        %v690 = vadd.f32 %v655, %v670
        %v691 = vadd.f32 %v656, %v670
        %v692 = vadd.f32 %v657, %v670
        %v693 = vadd.f32 %v658, %v670
        %v694 = vadd.f32 %v659, %v670
        %v695 = vadd.f32 %v660, %v670
        %v696 = vadd.f32 %v661, %v670
        %v697 = vadd.f32 %v662, %v670
        %v698 = vadd.f32 %v663, %v670
        %v699 = vadd.f32 %v664, %v670
        %v700 = vadd.f32 %v665, %v670
        %v701 = vadd.f32 %v666, %v670
        %v702 = vadd.f32 %v667, %v670
        %v703 = vadd.f32 %v668, %v670
        %v704 = vmax.f32 %v672, 0.0
        %v705 = vmax.f32 %v673, 0.0
        %v706 = vmax.f32 %v674, 0.0
        %v707 = vmax.f32 %v675, 0.0
        %v708 = vmax.f32 %v676, 0.0
        %v709 = vmax.f32 %v677, 0.0
        %v710 = vmax.f32 %v678, 0.0
        %v711 = vmax.f32 %v679, 0.0
        %v712 = vmax.f32 %v680, 0.0
        %v713 = vmax.f32 %v681, 0.0
        %v714 = vmax.f32 %v682, 0.0
        %v715 = vmax.f32 %v683, 0.0
        %v716 = vmax.f32 %v684, 0.0
        %v717 = vmax.f32 %v685, 0.0
        %v718 = vmax.f32 %v686, 0.0
        %v719 = vmax.f32 %v687, 0.0
        %v720 = vmax.f32 %v688, 0.0
        %v721 = vmax.f32 %v689, 0.0
        %v722 = vmax.f32 %v690, 0.0
        %v723 = vmax.f32 %v691, 0.0
        %v724 = vmax.f32 %v692, 0.0
        %v725 = vmax.f32 %v693, 0.0
        %v726 = vmax.f32 %v694, 0.0
        %v727 = vmax.f32 %v695, 0.0
        %v728 = vmax.f32 %v696, 0.0
        %v729 = vmax.f32 %v697, 0.0
        %v730 = vmax.f32 %v698, 0.0
        %v731 = vmax.f32 %v699, 0.0
        %v732 = vmax.f32 %v700, 0.0
        %v733 = vmax.f32 %v701, 0.0
        %v734 = vmax.f32 %v702, 0.0
        %v735 = vmax.f32 %v703, 0.0
        %s736 = scalar_lea.vmem [#allocation2], 24
        %737 = vst.msk [vmem:[%s736 + $0x1] sm:$0xff] %vm343, %v704
        %738 = vst.msk [vmem:[%s736 + $0x9] sm:$0xff] %vm343, %v705
        %739 = vst.msk [vmem:[%s736 + $0x19] sm:$0xff] %vm343, %v706
        %740 = vst.msk [vmem:[%s736 + $0x21] sm:$0xff] %vm343, %v707
        %741 = vst.msk [vmem:[%s736 + $0x31] sm:$0xff] %vm343, %v708
        %742 = vst.msk [vmem:[%s736 + $0x39] sm:$0xff] %vm343, %v709
        %743 = vst.msk [vmem:[%s736 + $0x49] sm:$0xff] %vm343, %v710
        %744 = vst.msk [vmem:[%s736 + $0x51] sm:$0xff] %vm343, %v711
        %745 = vst.msk [vmem:[%s736 + $0x61] sm:$0xff] %vm343, %v712
        %746 = vst.msk [vmem:[%s736 + $0x69] sm:$0xff] %vm343, %v713
        %747 = vst.msk [vmem:[%s736 + $0x79] sm:$0xff] %vm343, %v714
        %748 = vst.msk [vmem:[%s736 + $0x81] sm:$0xff] %vm343, %v715
        %749 = vst.msk [vmem:[%s736 + $0x91] sm:$0xff] %vm343, %v716
        %750 = vst.msk [vmem:[%s736 + $0x99] sm:$0xff] %vm343, %v717
        %751 = vst.msk [vmem:[%s736 + $0xa9] sm:$0xff] %vm343, %v718
        %752 = vst.msk [vmem:[%s736 + $0xb1] sm:$0xff] %vm343, %v719
        %753 = vst.msk [vmem:[%s736 + $0xc1] sm:$0xff] %vm343, %v720
        %754 = vst.msk [vmem:[%s736 + $0xc9] sm:$0xff] %vm343, %v721
        %755 = vst.msk [vmem:[%s736 + $0xd9] sm:$0xff] %vm343, %v722
        %756 = vst.msk [vmem:[%s736 + $0xe1] sm:$0xff] %vm343, %v723
        %757 = vst.msk [vmem:[%s736 + $0xf1] sm:$0xff] %vm343, %v724
        %758 = vst.msk [vmem:[%s736 + $0xf9] sm:$0xff] %vm343, %v725
        %759 = vst.msk [vmem:[%s736 + $0x109] sm:$0xff] %vm343, %v726
        %760 = vst.msk [vmem:[%s736 + $0x111] sm:$0xff] %vm343, %v727
        %761 = vst.msk [vmem:[%s736 + $0x121] sm:$0xff] %vm343, %v728
        %762 = vst.msk [vmem:[%s736 + $0x129] sm:$0xff] %vm343, %v729
        %763 = vst.msk [vmem:[%s736 + $0x139] sm:$0xff] %vm343, %v730
        %764 = vst.msk [vmem:[%s736 + $0x141] sm:$0xff] %vm343, %v731
        %765 = vst.msk [vmem:[%s736 + $0x151] sm:$0xff] %vm343, %v732
        %766 = vst.msk [vmem:[%s736 + $0x159] sm:$0xff] %vm343, %v733
        %767 = vst.msk [vmem:[%s736 + $0x169] sm:$0xff] %vm343, %v734
        %768 = vst.msk [vmem:[%s736 + $0x171] sm:$0xff] %vm343, %v735
        %v769 = vld [vmem:[#allocation2] sm:$0xff]
        %v770 = vld [vmem:[#allocation2 + $0x8] sm:$0xff]
        %v771 = vld [vmem:[#allocation2 + $0x18] sm:$0xff]
        %v772 = vld [vmem:[#allocation2 + $0x20] sm:$0xff]
        %v773 = vld [vmem:[#allocation2 + $0x30] sm:$0xff]
        %v774 = vld [vmem:[#allocation2 + $0x38] sm:$0xff]
        %v775 = vld [vmem:[#allocation2 + $0x48] sm:$0xff]
        %v776 = vld [vmem:[#allocation2 + $0x50] sm:$0xff]
        %v777 = vld [vmem:[#allocation2 + $0x60] sm:$0xff]
        %v778 = vld [vmem:[#allocation2 + $0x68] sm:$0xff]
        %v779 = vld [vmem:[#allocation2 + $0x78] sm:$0xff]
        %v780 = vld [vmem:[#allocation2 + $0x80] sm:$0xff]
        %v781 = vld [vmem:[#allocation2 + $0x90] sm:$0xff]
        %v782 = vld [vmem:[#allocation2 + $0x98] sm:$0xff]
        %v783 = vld [vmem:[#allocation2 + $0xa8] sm:$0xff]
        %v784 = vld [vmem:[#allocation2 + $0xb0] sm:$0xff]
        %v785 = vld [vmem:[#allocation2 + $0x1] sm:$0xff]
        %v786 = vld [vmem:[#allocation2 + $0x9] sm:$0xff]
        %v787 = vld [vmem:[#allocation2 + $0x19] sm:$0xff]
        %v788 = vld [vmem:[#allocation2 + $0x21] sm:$0xff]
        %v789 = vld [vmem:[#allocation2 + $0x31] sm:$0xff]
        %v790 = vld [vmem:[#allocation2 + $0x39] sm:$0xff]
        %v791 = vld [vmem:[#allocation2 + $0x49] sm:$0xff]
        %v792 = vld [vmem:[#allocation2 + $0x51] sm:$0xff]
        %v793 = vld [vmem:[#allocation2 + $0x61] sm:$0xff]
        %v794 = vld [vmem:[#allocation2 + $0x69] sm:$0xff]
        %v795 = vld [vmem:[#allocation2 + $0x79] sm:$0xff]
        %v796 = vld [vmem:[#allocation2 + $0x81] sm:$0xff]
        %v797 = vld [vmem:[#allocation2 + $0x91] sm:$0xff]
        %v798 = vld [vmem:[#allocation2 + $0x99] sm:$0xff]
        %v799 = vld [vmem:[#allocation2 + $0xa9] sm:$0xff]
        %v800 = vld [vmem:[#allocation2 + $0xb1] sm:$0xff]
        %v801 = vld [vmem:[#allocation2 + $0x2] sm:$0xff]
        %v802 = vld [vmem:[#allocation2 + $0xa] sm:$0xff]
        %v803 = vld [vmem:[#allocation2 + $0x1a] sm:$0xff]
        %v804 = vld [vmem:[#allocation2 + $0x22] sm:$0xff]
        %v805 = vld [vmem:[#allocation2 + $0x32] sm:$0xff]
        %v806 = vld [vmem:[#allocation2 + $0x3a] sm:$0xff]
        %v807 = vld [vmem:[#allocation2 + $0x4a] sm:$0xff]
        %v808 = vld [vmem:[#allocation2 + $0x52] sm:$0xff]
        %v809 = vld [vmem:[#allocation2 + $0x62] sm:$0xff]
        %v810 = vld [vmem:[#allocation2 + $0x6a] sm:$0xff]
        %v811 = vld [vmem:[#allocation2 + $0x7a] sm:$0xff]
        %v812 = vld [vmem:[#allocation2 + $0x82] sm:$0xff]
        %v813 = vld [vmem:[#allocation2 + $0x92] sm:$0xff]
        %v814 = vld [vmem:[#allocation2 + $0x9a] sm:$0xff]
        %v815 = vld [vmem:[#allocation2 + $0xaa] sm:$0xff]
        %v816 = vld [vmem:[#allocation2 + $0xb2] sm:$0xff]
        %v817 = vld [vmem:[%s736] sm:$0xff]
        %v818 = vld [vmem:[%s736 + $0x8] sm:$0xff]
        %v819 = vld [vmem:[%s736 + $0x18] sm:$0xff]
        %v820 = vld [vmem:[%s736 + $0x20] sm:$0xff]
        %v821 = vld [vmem:[%s736 + $0x30] sm:$0xff]
        %v822 = vld [vmem:[%s736 + $0x38] sm:$0xff]
        %v823 = vld [vmem:[%s736 + $0x48] sm:$0xff]
        %v824 = vld [vmem:[%s736 + $0x50] sm:$0xff]
        %v825 = vld [vmem:[%s736 + $0x60] sm:$0xff]
        %v826 = vld [vmem:[%s736 + $0x68] sm:$0xff]
        %v827 = vld [vmem:[%s736 + $0x78] sm:$0xff]
        %v828 = vld [vmem:[%s736 + $0x80] sm:$0xff]
        %v829 = vld [vmem:[%s736 + $0x90] sm:$0xff]
        %v830 = vld [vmem:[%s736 + $0x98] sm:$0xff]
        %v831 = vld [vmem:[%s736 + $0xa8] sm:$0xff]
        %v832 = vld [vmem:[%s736 + $0xb0] sm:$0xff]
        %v833 = vld [vmem:[%s736 + $0x1] sm:$0xff]
        %v834 = vld [vmem:[%s736 + $0x9] sm:$0xff]
        %v835 = vld [vmem:[%s736 + $0x19] sm:$0xff]
        %v836 = vld [vmem:[%s736 + $0x21] sm:$0xff]
        %v837 = vld [vmem:[%s736 + $0x31] sm:$0xff]
        %v838 = vld [vmem:[%s736 + $0x39] sm:$0xff]
        %v839 = vld [vmem:[%s736 + $0x49] sm:$0xff]
        %v840 = vld [vmem:[%s736 + $0x51] sm:$0xff]
        %v841 = vld [vmem:[%s736 + $0x61] sm:$0xff]
        %v842 = vld [vmem:[%s736 + $0x69] sm:$0xff]
        %v843 = vld [vmem:[%s736 + $0x79] sm:$0xff]
        %v844 = vld [vmem:[%s736 + $0x81] sm:$0xff]
        %v845 = vld [vmem:[%s736 + $0x91] sm:$0xff]
        %v846 = vld [vmem:[%s736 + $0x99] sm:$0xff]
        %v847 = vld [vmem:[%s736 + $0xa9] sm:$0xff]
        %v848 = vld [vmem:[%s736 + $0xb1] sm:$0xff]
        %v849 = vld [vmem:[%s736 + $0x2] sm:$0xff]
        %v850 = vld [vmem:[%s736 + $0xa] sm:$0xff]
        %v851 = vld [vmem:[%s736 + $0x1a] sm:$0xff]
        %v852 = vld [vmem:[%s736 + $0x22] sm:$0xff]
        %v853 = vld [vmem:[%s736 + $0x32] sm:$0xff]
        %v854 = vld [vmem:[%s736 + $0x3a] sm:$0xff]
        %v855 = vld [vmem:[%s736 + $0x4a] sm:$0xff]
        %v856 = vld [vmem:[%s736 + $0x52] sm:$0xff]
        %v857 = vld [vmem:[%s736 + $0x62] sm:$0xff]
        %v858 = vld [vmem:[%s736 + $0x6a] sm:$0xff]
        %v859 = vld [vmem:[%s736 + $0x7a] sm:$0xff]
        %v860 = vld [vmem:[%s736 + $0x82] sm:$0xff]
        %v861 = vld [vmem:[%s736 + $0x92] sm:$0xff]
        %v862 = vld [vmem:[%s736 + $0x9a] sm:$0xff]
        %v863 = vld [vmem:[%s736 + $0xaa] sm:$0xff]
        %v864 = vld [vmem:[%s736 + $0xb2] sm:$0xff]
        %s865 = scalar_lea.vmem [#allocation2], 48
        %v866 = vld [vmem:[%s865] sm:$0xff]
        %v867 = vld [vmem:[%s865 + $0x8] sm:$0xff]
        %v868 = vld [vmem:[%s865 + $0x18] sm:$0xff]
        %v869 = vld [vmem:[%s865 + $0x20] sm:$0xff]
        %v870 = vld [vmem:[%s865 + $0x30] sm:$0xff]
        %v871 = vld [vmem:[%s865 + $0x38] sm:$0xff]
        %v872 = vld [vmem:[%s865 + $0x48] sm:$0xff]
        %v873 = vld [vmem:[%s865 + $0x50] sm:$0xff]
        %v874 = vld [vmem:[%s865 + $0x60] sm:$0xff]
        %v875 = vld [vmem:[%s865 + $0x68] sm:$0xff]
        %v876 = vld [vmem:[%s865 + $0x78] sm:$0xff]
        %v877 = vld [vmem:[%s865 + $0x80] sm:$0xff]
        %v878 = vld [vmem:[%s865 + $0x90] sm:$0xff]
        %v879 = vld [vmem:[%s865 + $0x98] sm:$0xff]
        %v880 = vld [vmem:[%s865 + $0xa8] sm:$0xff]
        %v881 = vld [vmem:[%s865 + $0xb0] sm:$0xff]
        %v882 = vld [vmem:[%s865 + $0x1] sm:$0xff]
        %v883 = vld [vmem:[%s865 + $0x9] sm:$0xff]
        %v884 = vld [vmem:[%s865 + $0x19] sm:$0xff]
        %v885 = vld [vmem:[%s865 + $0x21] sm:$0xff]
        %v886 = vld [vmem:[%s865 + $0x31] sm:$0xff]
        %v887 = vld [vmem:[%s865 + $0x39] sm:$0xff]
        %v888 = vld [vmem:[%s865 + $0x49] sm:$0xff]
        %v889 = vld [vmem:[%s865 + $0x51] sm:$0xff]
        %v890 = vld [vmem:[%s865 + $0x61] sm:$0xff]
        %v891 = vld [vmem:[%s865 + $0x69] sm:$0xff]
        %v892 = vld [vmem:[%s865 + $0x79] sm:$0xff]
        %v893 = vld [vmem:[%s865 + $0x81] sm:$0xff]
        %v894 = vld [vmem:[%s865 + $0x91] sm:$0xff]
        %v895 = vld [vmem:[%s865 + $0x99] sm:$0xff]
        %v896 = vld [vmem:[%s865 + $0xa9] sm:$0xff]
        %v897 = vld [vmem:[%s865 + $0xb1] sm:$0xff]
        %v898 = vld [vmem:[%s865 + $0x2] sm:$0xff]
        %v899 = vld [vmem:[%s865 + $0xa] sm:$0xff]
        %v900 = vld [vmem:[%s865 + $0x1a] sm:$0xff]
        %v901 = vld [vmem:[%s865 + $0x22] sm:$0xff]
        %v902 = vld [vmem:[%s865 + $0x32] sm:$0xff]
        %v903 = vld [vmem:[%s865 + $0x3a] sm:$0xff]
        %v904 = vld [vmem:[%s865 + $0x4a] sm:$0xff]
        %v905 = vld [vmem:[%s865 + $0x52] sm:$0xff]
        %v906 = vld [vmem:[%s865 + $0x62] sm:$0xff]
        %v907 = vld [vmem:[%s865 + $0x6a] sm:$0xff]
        %v908 = vld [vmem:[%s865 + $0x7a] sm:$0xff]
        %v909 = vld [vmem:[%s865 + $0x82] sm:$0xff]
        %v910 = vld [vmem:[%s865 + $0x92] sm:$0xff]
        %v911 = vld [vmem:[%s865 + $0x9a] sm:$0xff]
        %v912 = vld [vmem:[%s865 + $0xaa] sm:$0xff]
        %v913 = vld [vmem:[%s865 + $0xb2] sm:$0xff]
        %930 = vrot.lane.b32.xlu0 %v785, 4
        %v931 = vpop.permute.xlu0 %930
        %932 = vrot.lane.b32.xlu0 %v786, 4
        %v933 = vpop.permute.xlu0 %932
        %934 = vrot.lane.b32.xlu0 %v787, 4
        %v935 = vpop.permute.xlu0 %934
        %936 = vrot.lane.b32.xlu0 %v788, 4
        %v937 = vpop.permute.xlu0 %936
        %938 = vrot.lane.b32.xlu0 %v789, 4
        %v939 = vpop.permute.xlu0 %938
        %940 = vrot.lane.b32.xlu0 %v790, 4
        %v941 = vpop.permute.xlu0 %940
        %942 = vrot.lane.b32.xlu0 %v791, 4
        %v943 = vpop.permute.xlu0 %942
        %944 = vrot.lane.b32.xlu0 %v792, 4
        %v945 = vpop.permute.xlu0 %944
        %946 = vrot.lane.b32.xlu0 %v793, 4
        %v947 = vpop.permute.xlu0 %946
        %948 = vrot.lane.b32.xlu0 %v794, 4
        %v949 = vpop.permute.xlu0 %948
        %950 = vrot.lane.b32.xlu0 %v795, 4
        %v951 = vpop.permute.xlu0 %950
        %952 = vrot.lane.b32.xlu0 %v796, 4
        %v953 = vpop.permute.xlu0 %952
        %954 = vrot.lane.b32.xlu0 %v797, 4
        %v955 = vpop.permute.xlu0 %954
        %956 = vrot.lane.b32.xlu0 %v798, 4
        %v957 = vpop.permute.xlu0 %956
        %958 = vrot.lane.b32.xlu0 %v799, 4
        %v959 = vpop.permute.xlu0 %958
        %960 = vrot.lane.b32.xlu0 %v800, 4
        %v961 = vpop.permute.xlu0 %960
        %994 = vrot.lane.b32.xlu0 %v801, 8
        %v995 = vpop.permute.xlu0 %994
        %996 = vrot.lane.b32.xlu0 %v802, 8
        %v997 = vpop.permute.xlu0 %996
        %998 = vrot.lane.b32.xlu0 %v803, 8
        %v999 = vpop.permute.xlu0 %998
        %1000 = vrot.lane.b32.xlu0 %v804, 8
        %v1001 = vpop.permute.xlu0 %1000
        %1002 = vrot.lane.b32.xlu0 %v805, 8
        %v1003 = vpop.permute.xlu0 %1002
        %1004 = vrot.lane.b32.xlu0 %v806, 8
        %v1005 = vpop.permute.xlu0 %1004
        %1006 = vrot.lane.b32.xlu0 %v807, 8
        %v1007 = vpop.permute.xlu0 %1006
        %1008 = vrot.lane.b32.xlu0 %v808, 8
        %v1009 = vpop.permute.xlu0 %1008
        %1010 = vrot.lane.b32.xlu0 %v809, 8
        %v1011 = vpop.permute.xlu0 %1010
        %1012 = vrot.lane.b32.xlu0 %v810, 8
        %v1013 = vpop.permute.xlu0 %1012
        %1014 = vrot.lane.b32.xlu0 %v811, 8
        %v1015 = vpop.permute.xlu0 %1014
        %1016 = vrot.lane.b32.xlu0 %v812, 8
        %v1017 = vpop.permute.xlu0 %1016
        %1018 = vrot.lane.b32.xlu0 %v813, 8
        %v1019 = vpop.permute.xlu0 %1018
        %1020 = vrot.lane.b32.xlu0 %v814, 8
        %v1021 = vpop.permute.xlu0 %1020
        %1022 = vrot.lane.b32.xlu0 %v815, 8
        %v1023 = vpop.permute.xlu0 %1022
        %1024 = vrot.lane.b32.xlu0 %v816, 8
        %v1025 = vpop.permute.xlu0 %1024
        %1058 = vrot.lane.b32.xlu0 %v817, 12
        %v1059 = vpop.permute.xlu0 %1058
        %1060 = vrot.lane.b32.xlu0 %v818, 12
        %v1061 = vpop.permute.xlu0 %1060
        %1062 = vrot.lane.b32.xlu0 %v819, 12
        %v1063 = vpop.permute.xlu0 %1062
        %1064 = vrot.lane.b32.xlu0 %v820, 12
        %v1065 = vpop.permute.xlu0 %1064
        %1066 = vrot.lane.b32.xlu0 %v821, 12
        %v1067 = vpop.permute.xlu0 %1066
        %1068 = vrot.lane.b32.xlu0 %v822, 12
        %v1069 = vpop.permute.xlu0 %1068
        %1070 = vrot.lane.b32.xlu0 %v823, 12
        %v1071 = vpop.permute.xlu0 %1070
        %1072 = vrot.lane.b32.xlu0 %v824, 12
        %v1073 = vpop.permute.xlu0 %1072
        %1074 = vrot.lane.b32.xlu0 %v825, 12
        %v1075 = vpop.permute.xlu0 %1074
        %1076 = vrot.lane.b32.xlu0 %v826, 12
        %v1077 = vpop.permute.xlu0 %1076
        %1078 = vrot.lane.b32.xlu0 %v827, 12
        %v1079 = vpop.permute.xlu0 %1078
        %1080 = vrot.lane.b32.xlu0 %v828, 12
        %v1081 = vpop.permute.xlu0 %1080
        %1082 = vrot.lane.b32.xlu0 %v829, 12
        %v1083 = vpop.permute.xlu0 %1082
        %1084 = vrot.lane.b32.xlu0 %v830, 12
        %v1085 = vpop.permute.xlu0 %1084
        %1086 = vrot.lane.b32.xlu0 %v831, 12
        %v1087 = vpop.permute.xlu0 %1086
        %1088 = vrot.lane.b32.xlu0 %v832, 12
        %v1089 = vpop.permute.xlu0 %1088
        %1122 = vrot.lane.b32.xlu0 %v833, 16
        %v1123 = vpop.permute.xlu0 %1122
        %1124 = vrot.lane.b32.xlu0 %v834, 16
        %v1125 = vpop.permute.xlu0 %1124
        %1126 = vrot.lane.b32.xlu0 %v835, 16
        %v1127 = vpop.permute.xlu0 %1126
        %1128 = vrot.lane.b32.xlu0 %v836, 16
        %v1129 = vpop.permute.xlu0 %1128
        %1130 = vrot.lane.b32.xlu0 %v837, 16
        %v1131 = vpop.permute.xlu0 %1130
        %1132 = vrot.lane.b32.xlu0 %v838, 16
        %v1133 = vpop.permute.xlu0 %1132
        %1134 = vrot.lane.b32.xlu0 %v839, 16
        %v1135 = vpop.permute.xlu0 %1134
        %1136 = vrot.lane.b32.xlu0 %v840, 16
        %v1137 = vpop.permute.xlu0 %1136
        %1138 = vrot.lane.b32.xlu0 %v841, 16
        %v1139 = vpop.permute.xlu0 %1138
        %1140 = vrot.lane.b32.xlu0 %v842, 16
        %v1141 = vpop.permute.xlu0 %1140
        %1142 = vrot.lane.b32.xlu0 %v843, 16
        %v1143 = vpop.permute.xlu0 %1142
        %1144 = vrot.lane.b32.xlu0 %v844, 16
        %v1145 = vpop.permute.xlu0 %1144
        %1146 = vrot.lane.b32.xlu0 %v845, 16
        %v1147 = vpop.permute.xlu0 %1146
        %1148 = vrot.lane.b32.xlu0 %v846, 16
        %v1149 = vpop.permute.xlu0 %1148
        %1150 = vrot.lane.b32.xlu0 %v847, 16
        %v1151 = vpop.permute.xlu0 %1150
        %1152 = vrot.lane.b32.xlu0 %v848, 16
        %v1153 = vpop.permute.xlu0 %1152
        %1186 = vrot.lane.b32.xlu0 %v849, 20
        %v1187 = vpop.permute.xlu0 %1186
        %1188 = vrot.lane.b32.xlu0 %v850, 20
        %v1189 = vpop.permute.xlu0 %1188
        %1190 = vrot.lane.b32.xlu0 %v851, 20
        %v1191 = vpop.permute.xlu0 %1190
        %1192 = vrot.lane.b32.xlu0 %v852, 20
        %v1193 = vpop.permute.xlu0 %1192
        %1194 = vrot.lane.b32.xlu0 %v853, 20
        %v1195 = vpop.permute.xlu0 %1194
        %1196 = vrot.lane.b32.xlu0 %v854, 20
        %v1197 = vpop.permute.xlu0 %1196
        %1198 = vrot.lane.b32.xlu0 %v855, 20
        %v1199 = vpop.permute.xlu0 %1198
        %1200 = vrot.lane.b32.xlu0 %v856, 20
        %v1201 = vpop.permute.xlu0 %1200
        %1202 = vrot.lane.b32.xlu0 %v857, 20
        %v1203 = vpop.permute.xlu0 %1202
        %1204 = vrot.lane.b32.xlu0 %v858, 20
        %v1205 = vpop.permute.xlu0 %1204
        %1206 = vrot.lane.b32.xlu0 %v859, 20
        %v1207 = vpop.permute.xlu0 %1206
        %1208 = vrot.lane.b32.xlu0 %v860, 20
        %v1209 = vpop.permute.xlu0 %1208
        %1210 = vrot.lane.b32.xlu0 %v861, 20
        %v1211 = vpop.permute.xlu0 %1210
        %1212 = vrot.lane.b32.xlu0 %v862, 20
        %v1213 = vpop.permute.xlu0 %1212
        %1214 = vrot.lane.b32.xlu0 %v863, 20
        %v1215 = vpop.permute.xlu0 %1214
        %1216 = vrot.lane.b32.xlu0 %v864, 20
        %v1217 = vpop.permute.xlu0 %1216
        %1250 = vrot.lane.b32.xlu0 %v866, 24
        %v1251 = vpop.permute.xlu0 %1250
        %1252 = vrot.lane.b32.xlu0 %v867, 24
        %v1253 = vpop.permute.xlu0 %1252
        %1254 = vrot.lane.b32.xlu0 %v868, 24
        %v1255 = vpop.permute.xlu0 %1254
        %1256 = vrot.lane.b32.xlu0 %v869, 24
        %v1257 = vpop.permute.xlu0 %1256
        %1258 = vrot.lane.b32.xlu0 %v870, 24
        %v1259 = vpop.permute.xlu0 %1258
        %1260 = vrot.lane.b32.xlu0 %v871, 24
        %v1261 = vpop.permute.xlu0 %1260
        %1262 = vrot.lane.b32.xlu0 %v872, 24
        %v1263 = vpop.permute.xlu0 %1262
        %1264 = vrot.lane.b32.xlu0 %v873, 24
        %v1265 = vpop.permute.xlu0 %1264
        %1266 = vrot.lane.b32.xlu0 %v874, 24
        %v1267 = vpop.permute.xlu0 %1266
        %1268 = vrot.lane.b32.xlu0 %v875, 24
        %v1269 = vpop.permute.xlu0 %1268
        %1270 = vrot.lane.b32.xlu0 %v876, 24
        %v1271 = vpop.permute.xlu0 %1270
        %1272 = vrot.lane.b32.xlu0 %v877, 24
        %v1273 = vpop.permute.xlu0 %1272
        %1274 = vrot.lane.b32.xlu0 %v878, 24
        %v1275 = vpop.permute.xlu0 %1274
        %1276 = vrot.lane.b32.xlu0 %v879, 24
        %v1277 = vpop.permute.xlu0 %1276
        %1278 = vrot.lane.b32.xlu0 %v880, 24
        %v1279 = vpop.permute.xlu0 %1278
        %1280 = vrot.lane.b32.xlu0 %v881, 24
        %v1281 = vpop.permute.xlu0 %1280
        %1314 = vrot.lane.b32.xlu0 %v882, 28
        %v1315 = vpop.permute.xlu0 %1314
        %1316 = vrot.lane.b32.xlu0 %v883, 28
        %v1317 = vpop.permute.xlu0 %1316
        %1318 = vrot.lane.b32.xlu0 %v884, 28
        %v1319 = vpop.permute.xlu0 %1318
        %1320 = vrot.lane.b32.xlu0 %v885, 28
        %v1321 = vpop.permute.xlu0 %1320
        %1322 = vrot.lane.b32.xlu0 %v886, 28
        %v1323 = vpop.permute.xlu0 %1322
        %1324 = vrot.lane.b32.xlu0 %v887, 28
        %v1325 = vpop.permute.xlu0 %1324
        %1326 = vrot.lane.b32.xlu0 %v888, 28
        %v1327 = vpop.permute.xlu0 %1326
        %1328 = vrot.lane.b32.xlu0 %v889, 28
        %v1329 = vpop.permute.xlu0 %1328
        %1330 = vrot.lane.b32.xlu0 %v890, 28
        %v1331 = vpop.permute.xlu0 %1330
        %1332 = vrot.lane.b32.xlu0 %v891, 28
        %v1333 = vpop.permute.xlu0 %1332
        %1334 = vrot.lane.b32.xlu0 %v892, 28
        %v1335 = vpop.permute.xlu0 %1334
        %1336 = vrot.lane.b32.xlu0 %v893, 28
        %v1337 = vpop.permute.xlu0 %1336
        %1338 = vrot.lane.b32.xlu0 %v894, 28
        %v1339 = vpop.permute.xlu0 %1338
        %1340 = vrot.lane.b32.xlu0 %v895, 28
        %v1341 = vpop.permute.xlu0 %1340
        %1342 = vrot.lane.b32.xlu0 %v896, 28
        %v1343 = vpop.permute.xlu0 %1342
        %1344 = vrot.lane.b32.xlu0 %v897, 28
        %v1345 = vpop.permute.xlu0 %1344
        %1378 = vrot.lane.b32.xlu0 %v898, 32
        %v1379 = vpop.permute.xlu0 %1378
        %1380 = vrot.lane.b32.xlu0 %v899, 32
        %v1381 = vpop.permute.xlu0 %1380
        %1382 = vrot.lane.b32.xlu0 %v900, 32
        %v1383 = vpop.permute.xlu0 %1382
        %1384 = vrot.lane.b32.xlu0 %v901, 32
        %v1385 = vpop.permute.xlu0 %1384
        %1386 = vrot.lane.b32.xlu0 %v902, 32
        %v1387 = vpop.permute.xlu0 %1386
        %1388 = vrot.lane.b32.xlu0 %v903, 32
        %v1389 = vpop.permute.xlu0 %1388
        %1390 = vrot.lane.b32.xlu0 %v904, 32
        %v1391 = vpop.permute.xlu0 %1390
        %1392 = vrot.lane.b32.xlu0 %v905, 32
        %v1393 = vpop.permute.xlu0 %1392
        %1394 = vrot.lane.b32.xlu0 %v906, 32
        %v1395 = vpop.permute.xlu0 %1394
        %1396 = vrot.lane.b32.xlu0 %v907, 32
        %v1397 = vpop.permute.xlu0 %1396
        %1398 = vrot.lane.b32.xlu0 %v908, 32
        %v1399 = vpop.permute.xlu0 %1398
        %1400 = vrot.lane.b32.xlu0 %v909, 32
        %v1401 = vpop.permute.xlu0 %1400
        %1402 = vrot.lane.b32.xlu0 %v910, 32
        %v1403 = vpop.permute.xlu0 %1402
        %1404 = vrot.lane.b32.xlu0 %v911, 32
        %v1405 = vpop.permute.xlu0 %1404
        %1406 = vrot.lane.b32.xlu0 %v912, 32
        %v1407 = vpop.permute.xlu0 %1406
        %1408 = vrot.lane.b32.xlu0 %v913, 32
        %v1409 = vpop.permute.xlu0 %1408
        %v1426 = vsel %vm343, %v769, %v931
        %v1427 = vsel %vm343, %v770, %v933
        %v1428 = vsel %vm343, %v771, %v935
        %v1429 = vsel %vm343, %v772, %v937
        %v1430 = vsel %vm343, %v773, %v939
        %v1431 = vsel %vm343, %v774, %v941
        %v1432 = vsel %vm343, %v775, %v943
        %v1433 = vsel %vm343, %v776, %v945
        %v1434 = vsel %vm343, %v777, %v947
        %v1435 = vsel %vm343, %v778, %v949
        %v1436 = vsel %vm343, %v779, %v951
        %v1437 = vsel %vm343, %v780, %v953
        %v1438 = vsel %vm343, %v781, %v955
        %v1439 = vsel %vm343, %v782, %v957
        %v1440 = vsel %vm343, %v783, %v959
        %v1441 = vsel %vm343, %v784, %v961
        %vm1442 = vcmask 64512
        %v1443 = vsel %vm1442, %v1426, %v995
        %v1444 = vsel %vm1442, %v1427, %v997
        %v1445 = vsel %vm1442, %v1428, %v999
        %v1446 = vsel %vm1442, %v1429, %v1001
        %v1447 = vsel %vm1442, %v1430, %v1003
        %v1448 = vsel %vm1442, %v1431, %v1005
        %v1449 = vsel %vm1442, %v1432, %v1007
        %v1450 = vsel %vm1442, %v1433, %v1009
        %v1451 = vsel %vm1442, %v1434, %v1011
        %v1452 = vsel %vm1442, %v1435, %v1013
        %v1453 = vsel %vm1442, %v1436, %v1015
        %v1454 = vsel %vm1442, %v1437, %v1017
        %v1455 = vsel %vm1442, %v1438, %v1019
        %v1456 = vsel %vm1442, %v1439, %v1021
        %v1457 = vsel %vm1442, %v1440, %v1023
        %v1458 = vsel %vm1442, %v1441, %v1025
        %vm1459 = vcmask 97280
        %v1460 = vsel %vm1459, %v1443, %v1059
        %v1461 = vsel %vm1459, %v1444, %v1061
        %v1462 = vsel %vm1459, %v1445, %v1063
        %v1463 = vsel %vm1459, %v1446, %v1065
        %v1464 = vsel %vm1459, %v1447, %v1067
        %v1465 = vsel %vm1459, %v1448, %v1069
        %v1466 = vsel %vm1459, %v1449, %v1071
        %v1467 = vsel %vm1459, %v1450, %v1073
        %v1468 = vsel %vm1459, %v1451, %v1075
        %v1469 = vsel %vm1459, %v1452, %v1077
        %v1470 = vsel %vm1459, %v1453, %v1079
        %v1471 = vsel %vm1459, %v1454, %v1081
        %v1472 = vsel %vm1459, %v1455, %v1083
        %v1473 = vsel %vm1459, %v1456, %v1085
        %v1474 = vsel %vm1459, %v1457, %v1087
        %v1475 = vsel %vm1459, %v1458, %v1089
        %vm1476 = vcmask 130048
        %v1477 = vsel %vm1476, %v1460, %v1123
        %v1478 = vsel %vm1476, %v1461, %v1125
        %v1479 = vsel %vm1476, %v1462, %v1127
        %v1480 = vsel %vm1476, %v1463, %v1129
        %v1481 = vsel %vm1476, %v1464, %v1131
        %v1482 = vsel %vm1476, %v1465, %v1133
        %v1483 = vsel %vm1476, %v1466, %v1135
        %v1484 = vsel %vm1476, %v1467, %v1137
        %v1485 = vsel %vm1476, %v1468, %v1139
        %v1486 = vsel %vm1476, %v1469, %v1141
        %v1487 = vsel %vm1476, %v1470, %v1143
        %v1488 = vsel %vm1476, %v1471, %v1145
        %v1489 = vsel %vm1476, %v1472, %v1147
        %v1490 = vsel %vm1476, %v1473, %v1149
        %v1491 = vsel %vm1476, %v1474, %v1151
        %v1492 = vsel %vm1476, %v1475, %v1153
        %vm1493 = vcmask 162816
        %v1494 = vsel %vm1493, %v1477, %v1187
        %v1495 = vsel %vm1493, %v1478, %v1189
        %v1496 = vsel %vm1493, %v1479, %v1191
        %v1497 = vsel %vm1493, %v1480, %v1193
        %v1498 = vsel %vm1493, %v1481, %v1195
        %v1499 = vsel %vm1493, %v1482, %v1197
        %v1500 = vsel %vm1493, %v1483, %v1199
        %v1501 = vsel %vm1493, %v1484, %v1201
        %v1502 = vsel %vm1493, %v1485, %v1203
        %v1503 = vsel %vm1493, %v1486, %v1205
        %v1504 = vsel %vm1493, %v1487, %v1207
        %v1505 = vsel %vm1493, %v1488, %v1209
        %v1506 = vsel %vm1493, %v1489, %v1211
        %v1507 = vsel %vm1493, %v1490, %v1213
        %v1508 = vsel %vm1493, %v1491, %v1215
        %v1509 = vsel %vm1493, %v1492, %v1217
        %vm1510 = vcmask 195584
        %v1511 = vsel %vm1510, %v1494, %v1251
        %v1512 = vsel %vm1510, %v1495, %v1253
        %v1513 = vsel %vm1510, %v1496, %v1255
        %v1514 = vsel %vm1510, %v1497, %v1257
        %v1515 = vsel %vm1510, %v1498, %v1259
        %v1516 = vsel %vm1510, %v1499, %v1261
        %v1517 = vsel %vm1510, %v1500, %v1263
        %v1518 = vsel %vm1510, %v1501, %v1265
        %v1519 = vsel %vm1510, %v1502, %v1267
        %v1520 = vsel %vm1510, %v1503, %v1269
        %v1521 = vsel %vm1510, %v1504, %v1271
        %v1522 = vsel %vm1510, %v1505, %v1273
        %v1523 = vsel %vm1510, %v1506, %v1275
        %v1524 = vsel %vm1510, %v1507, %v1277
        %v1525 = vsel %vm1510, %v1508, %v1279
        %v1526 = vsel %vm1510, %v1509, %v1281
        %vm1527 = vcmask 228352
        %v1528 = vsel %vm1527, %v1511, %v1315
        %v1529 = vsel %vm1527, %v1512, %v1317
        %v1530 = vsel %vm1527, %v1513, %v1319
        %v1531 = vsel %vm1527, %v1514, %v1321
        %v1532 = vsel %vm1527, %v1515, %v1323
        %v1533 = vsel %vm1527, %v1516, %v1325
        %v1534 = vsel %vm1527, %v1517, %v1327
        %v1535 = vsel %vm1527, %v1518, %v1329
        %v1536 = vsel %vm1527, %v1519, %v1331
        %v1537 = vsel %vm1527, %v1520, %v1333
        %v1538 = vsel %vm1527, %v1521, %v1335
        %v1539 = vsel %vm1527, %v1522, %v1337
        %v1540 = vsel %vm1527, %v1523, %v1339
        %v1541 = vsel %vm1527, %v1524, %v1341
        %v1542 = vsel %vm1527, %v1525, %v1343
        %v1543 = vsel %vm1527, %v1526, %v1345
        %vm1544 = vcmask 261120
        %v1545 = vsel %vm1544, %v1528, %v1379
        %v1546 = vsel %vm1544, %v1529, %v1381
        %v1547 = vsel %vm1544, %v1530, %v1383
        %v1548 = vsel %vm1544, %v1531, %v1385
        %v1549 = vsel %vm1544, %v1532, %v1387
        %v1550 = vsel %vm1544, %v1533, %v1389
        %v1551 = vsel %vm1544, %v1534, %v1391
        %v1552 = vsel %vm1544, %v1535, %v1393
        %v1553 = vsel %vm1544, %v1536, %v1395
        %v1554 = vsel %vm1544, %v1537, %v1397
        %v1555 = vsel %vm1544, %v1538, %v1399
        %v1556 = vsel %vm1544, %v1539, %v1401
        %v1557 = vsel %vm1544, %v1540, %v1403
        %v1558 = vsel %vm1544, %v1541, %v1405
        %v1559 = vsel %vm1544, %v1542, %v1407
        %v1560 = vsel %vm1544, %v1543, %v1409
        %vm1561 = vcmask 293888
        %v1563 = vsel %vm1561, %v1545, 0
        %v1566 = vsel %vm1561, %v1546, 0
        %v1569 = vsel %vm1561, %v1547, 0
        %v1572 = vsel %vm1561, %v1548, 0
        %v1575 = vsel %vm1561, %v1549, 0
        %v1578 = vsel %vm1561, %v1550, 0
        %v1581 = vsel %vm1561, %v1551, 0
        %v1584 = vsel %vm1561, %v1552, 0
        %v1587 = vsel %vm1561, %v1553, 0
        %v1590 = vsel %vm1561, %v1554, 0
        %v1593 = vsel %vm1561, %v1555, 0
        %v1596 = vsel %vm1561, %v1556, 0
        %v1599 = vsel %vm1561, %v1557, 0
        %v1602 = vsel %vm1561, %v1558, 0
        %v1605 = vsel %vm1561, %v1559, 0
        %v1608 = vsel %vm1561, %v1560, 0
        %v1611 = vsel %vm517, %v338, 0
        %1613 = vmatpush.msra.mxu0 0.0
        %1614 = vmatpush.msra.mxu0 0.0
        %1615 = vmatpush.msra.mxu0 0.0
        %1616 = vmatpush.msra.mxu0 0.0
        %1617 = vmatpush.msra.mxu0 0.0
        %1618 = vmatpush.msra.mxu0 0.0
        %1619 = vmatpush.msra.mxu0 0.0
        %1620 = vmatpush.msra.mxu0 0.0
        %1621 = vmatpush.msra.mxu0 0.0
        %1622 = vmatpush.msra.mxu0 0.0
        %1623 = vmatpush.msra.mxu0 0.0
        %1624 = vmatpush.msra.mxu0 %v1611
        %1625 = vmatpush.msra.mxu0 %v337
        %1626 = vmatpush.msra.mxu0 %v336
        %1627 = vmatpush.msra.mxu0 %v335
        %1628 = vmatpush.msra.mxu0 %v334
        %1629 = vmatmul.f32.gmra.mxu0 %v1563
        %v1630 = vpop.f32.mrf.mxu0
        %v1631 = vadd.f32 0.0, %v1630
        %1632 = vmatmul.f32.gmra.mxu0 %v1566
        %v1633 = vpop.f32.mrf.mxu0
        %v1634 = vadd.f32 0.0, %v1633
        %1635 = vmatmul.f32.gmra.mxu0 %v1569
        %v1636 = vpop.f32.mrf.mxu0
        %v1637 = vadd.f32 0.0, %v1636
        %1638 = vmatmul.f32.gmra.mxu0 %v1572
        %v1639 = vpop.f32.mrf.mxu0
        %v1640 = vadd.f32 0.0, %v1639
        %1641 = vmatmul.f32.gmra.mxu0 %v1575
        %v1642 = vpop.f32.mrf.mxu0
        %v1643 = vadd.f32 0.0, %v1642
        %1644 = vmatmul.f32.gmra.mxu0 %v1578
        %v1645 = vpop.f32.mrf.mxu0
        %v1646 = vadd.f32 0.0, %v1645
        %1647 = vmatmul.f32.gmra.mxu0 %v1581
        %v1648 = vpop.f32.mrf.mxu0
        %v1649 = vadd.f32 0.0, %v1648
        %1650 = vmatmul.f32.gmra.mxu0 %v1584
        %v1651 = vpop.f32.mrf.mxu0
        %v1652 = vadd.f32 0.0, %v1651
        %1653 = vmatmul.f32.gmra.mxu0 %v1587
        %v1654 = vpop.f32.mrf.mxu0
        %v1655 = vadd.f32 0.0, %v1654
        %1656 = vmatmul.f32.gmra.mxu0 %v1590
        %v1657 = vpop.f32.mrf.mxu0
        %v1658 = vadd.f32 0.0, %v1657
        %1659 = vmatmul.f32.gmra.mxu0 %v1593
        %v1660 = vpop.f32.mrf.mxu0
        %v1661 = vadd.f32 0.0, %v1660
        %1662 = vmatmul.f32.gmra.mxu0 %v1596
        %v1663 = vpop.f32.mrf.mxu0
        %v1664 = vadd.f32 0.0, %v1663
        %1665 = vmatmul.f32.gmra.mxu0 %v1599
        %v1666 = vpop.f32.mrf.mxu0
        %v1667 = vadd.f32 0.0, %v1666
        %1668 = vmatmul.f32.gmra.mxu0 %v1602
        %v1669 = vpop.f32.mrf.mxu0
        %v1670 = vadd.f32 0.0, %v1669
        %1671 = vmatmul.f32.gmra.mxu0 %v1605
        %v1672 = vpop.f32.mrf.mxu0
        %v1673 = vadd.f32 0.0, %v1672
        %1674 = vmatmul.f32.gmra.mxu0 %v1608
        %v1675 = vpop.f32.mrf.mxu0
        %v1676 = vadd.f32 0.0, %v1675
        %1677 = vdwg.mxu0
        %v1679 = vperm.slane %v339, 0
        %v1681 = vmul.f32 %v1631, %v1679
        %v1682 = vmul.f32 %v1634, %v1679
        %v1683 = vmul.f32 %v1637, %v1679
        %v1684 = vmul.f32 %v1640, %v1679
        %v1685 = vmul.f32 %v1643, %v1679
        %v1686 = vmul.f32 %v1646, %v1679
        %v1687 = vmul.f32 %v1649, %v1679
        %v1688 = vmul.f32 %v1652, %v1679
        %v1689 = vmul.f32 %v1655, %v1679
        %v1690 = vmul.f32 %v1658, %v1679
        %v1691 = vmul.f32 %v1661, %v1679
        %v1692 = vmul.f32 %v1664, %v1679
        %v1693 = vmul.f32 %v1667, %v1679
        %v1694 = vmul.f32 %v1670, %v1679
        %v1695 = vmul.f32 %v1673, %v1679
        %v1696 = vmul.f32 %v1676, %v1679
        %v1698 = vperm.slane %v340, 0
        %v1700 = vadd.f32 %v1681, %v1698
        %v1701 = vadd.f32 %v1682, %v1698
        %v1702 = vadd.f32 %v1683, %v1698
        %v1703 = vadd.f32 %v1684, %v1698
        %v1704 = vadd.f32 %v1685, %v1698
        %v1705 = vadd.f32 %v1686, %v1698
        %v1706 = vadd.f32 %v1687, %v1698
        %v1707 = vadd.f32 %v1688, %v1698
        %v1708 = vadd.f32 %v1689, %v1698
        %v1709 = vadd.f32 %v1690, %v1698
        %v1710 = vadd.f32 %v1691, %v1698
        %v1711 = vadd.f32 %v1692, %v1698
        %v1712 = vadd.f32 %v1693, %v1698
        %v1713 = vadd.f32 %v1694, %v1698
        %v1714 = vadd.f32 %v1695, %v1698
        %v1715 = vadd.f32 %v1696, %v1698
        %v1716 = vmax.f32 %v1700, 0.0
        %v1717 = vmax.f32 %v1701, 0.0
        %v1718 = vmax.f32 %v1702, 0.0
        %v1719 = vmax.f32 %v1703, 0.0
        %v1720 = vmax.f32 %v1704, 0.0
        %v1721 = vmax.f32 %v1705, 0.0
        %v1722 = vmax.f32 %v1706, 0.0
        %v1723 = vmax.f32 %v1707, 0.0
        %v1724 = vmax.f32 %v1708, 0.0
        %v1725 = vmax.f32 %v1709, 0.0
        %v1726 = vmax.f32 %v1710, 0.0
        %v1727 = vmax.f32 %v1711, 0.0
        %v1728 = vmax.f32 %v1712, 0.0
        %v1729 = vmax.f32 %v1713, 0.0
        %v1730 = vmax.f32 %v1714, 0.0
        %v1731 = vmax.f32 %v1715, 0.0
        %v1732 = vld [vmem:[%s330] sm:$0xff]
        %v1733 = vld [vmem:[%s330 + $0x8] sm:$0xff]
        %v1734 = vld [vmem:[%s330 + $0x10] sm:$0xff]
        %v1735 = vld [vmem:[%s330 + $0x18] sm:$0xff]
        %v1736 = vld [vmem:[%s330 + $0x20] sm:$0xff]
        %v1737 = vld [vmem:[%s330 + $0x28] sm:$0xff]
        %v1738 = vld [vmem:[%s330 + $0x30] sm:$0xff]
        %v1739 = vld [vmem:[%s330 + $0x38] sm:$0xff]
        %v1740 = vld [vmem:[%s330 + $0x40] sm:$0xff]
        %v1741 = vld [vmem:[%s330 + $0x48] sm:$0xff]
        %v1742 = vld [vmem:[%s330 + $0x50] sm:$0xff]
        %v1743 = vld [vmem:[%s330 + $0x58] sm:$0xff]
        %v1744 = vld [vmem:[%s330 + $0x60] sm:$0xff]
        %v1745 = vld [vmem:[%s330 + $0x68] sm:$0xff]
        %v1746 = vld [vmem:[%s330 + $0x70] sm:$0xff]
        %v1747 = vld [vmem:[%s330 + $0x78] sm:$0xff]
        %v1749 = vsel %vm343, %v1732, 0
        %v1752 = vsel %vm343, %v1733, 0
        %v1755 = vsel %vm343, %v1734, 0
        %v1758 = vsel %vm343, %v1735, 0
        %v1761 = vsel %vm343, %v1736, 0
        %v1764 = vsel %vm343, %v1737, 0
        %v1767 = vsel %vm343, %v1738, 0
        %v1770 = vsel %vm343, %v1739, 0
        %v1773 = vsel %vm343, %v1740, 0
        %v1776 = vsel %vm343, %v1741, 0
        %v1779 = vsel %vm343, %v1742, 0
        %v1782 = vsel %vm343, %v1743, 0
        %v1785 = vsel %vm343, %v1744, 0
        %v1788 = vsel %vm343, %v1745, 0
        %v1791 = vsel %vm343, %v1746, 0
        %v1794 = vsel %vm343, %v1747, 0
        %v1797 = vsel %vm517, %v342, 0
        %1799 = vmatpush.msra.mxu0 0.0
        %1800 = vmatpush.msra.mxu0 0.0
        %1801 = vmatpush.msra.mxu0 0.0
        %1802 = vmatpush.msra.mxu0 0.0
        %1803 = vmatpush.msra.mxu0 0.0
        %1804 = vmatpush.msra.mxu0 0.0
        %1805 = vmatpush.msra.mxu0 0.0
        %1806 = vmatpush.msra.mxu0 0.0
        %1807 = vmatpush.msra.mxu0 0.0
        %1808 = vmatpush.msra.mxu0 0.0
        %1809 = vmatpush.msra.mxu0 0.0
        %1810 = vmatpush.msra.mxu0 0.0
        %1811 = vmatpush.msra.mxu0 0.0
        %1812 = vmatpush.msra.mxu0 0.0
        %1813 = vmatpush.msra.mxu0 0.0
        %1814 = vmatpush.msra.mxu0 %v1797
        %1815 = vmatmul.f32.gmra.mxu0 %v1749
        %v1816 = vpop.f32.mrf.mxu0
        %v1817 = vadd.f32 0.0, %v1816
        %1818 = vmatmul.f32.gmra.mxu0 %v1752
        %v1819 = vpop.f32.mrf.mxu0
        %v1820 = vadd.f32 0.0, %v1819
        %1821 = vmatmul.f32.gmra.mxu0 %v1755
        %v1822 = vpop.f32.mrf.mxu0
        %v1823 = vadd.f32 0.0, %v1822
        %1824 = vmatmul.f32.gmra.mxu0 %v1758
        %v1825 = vpop.f32.mrf.mxu0
        %v1826 = vadd.f32 0.0, %v1825
        %1827 = vmatmul.f32.gmra.mxu0 %v1761
        %v1828 = vpop.f32.mrf.mxu0
        %v1829 = vadd.f32 0.0, %v1828
        %1830 = vmatmul.f32.gmra.mxu0 %v1764
        %v1831 = vpop.f32.mrf.mxu0
        %v1832 = vadd.f32 0.0, %v1831
        %1833 = vmatmul.f32.gmra.mxu0 %v1767
        %v1834 = vpop.f32.mrf.mxu0
        %v1835 = vadd.f32 0.0, %v1834
        %1836 = vmatmul.f32.gmra.mxu0 %v1770
        %v1837 = vpop.f32.mrf.mxu0
        %v1838 = vadd.f32 0.0, %v1837
        %1839 = vmatmul.f32.gmra.mxu0 %v1773
        %v1840 = vpop.f32.mrf.mxu0
        %v1841 = vadd.f32 0.0, %v1840
        %1842 = vmatmul.f32.gmra.mxu0 %v1776
        %v1843 = vpop.f32.mrf.mxu0
        %v1844 = vadd.f32 0.0, %v1843
        %1845 = vmatmul.f32.gmra.mxu0 %v1779
        %v1846 = vpop.f32.mrf.mxu0
        %v1847 = vadd.f32 0.0, %v1846
        %1848 = vmatmul.f32.gmra.mxu0 %v1782
        %v1849 = vpop.f32.mrf.mxu0
        %v1850 = vadd.f32 0.0, %v1849
        %1851 = vmatmul.f32.gmra.mxu0 %v1785
        %v1852 = vpop.f32.mrf.mxu0
        %v1853 = vadd.f32 0.0, %v1852
        %1854 = vmatmul.f32.gmra.mxu0 %v1788
        %v1855 = vpop.f32.mrf.mxu0
        %v1856 = vadd.f32 0.0, %v1855
        %1857 = vmatmul.f32.gmra.mxu0 %v1791
        %v1858 = vpop.f32.mrf.mxu0
        %v1859 = vadd.f32 0.0, %v1858
        %1860 = vmatmul.f32.gmra.mxu0 %v1794
        %v1861 = vpop.f32.mrf.mxu0
        %v1862 = vadd.f32 0.0, %v1861
        %1863 = vdwg.mxu0
        %v1865 = vsel %vm343, %v1716, 0
        %v1868 = vsel %vm343, %v1717, 0
        %v1871 = vsel %vm343, %v1718, 0
        %v1874 = vsel %vm343, %v1719, 0
        %v1877 = vsel %vm343, %v1720, 0
        %v1880 = vsel %vm343, %v1721, 0
        %v1883 = vsel %vm343, %v1722, 0
        %v1886 = vsel %vm343, %v1723, 0
        %v1889 = vsel %vm343, %v1724, 0
        %v1892 = vsel %vm343, %v1725, 0
        %v1895 = vsel %vm343, %v1726, 0
        %v1898 = vsel %vm343, %v1727, 0
        %v1901 = vsel %vm343, %v1728, 0
        %v1904 = vsel %vm343, %v1729, 0
        %v1907 = vsel %vm343, %v1730, 0
        %v1910 = vsel %vm343, %v1731, 0
        %v1913 = vsel %vm517, %v341, 0
        %1915 = vmatpush.msra.mxu0 0.0
        %1916 = vmatpush.msra.mxu0 0.0
        %1917 = vmatpush.msra.mxu0 0.0
        %1918 = vmatpush.msra.mxu0 0.0
        %1919 = vmatpush.msra.mxu0 0.0
        %1920 = vmatpush.msra.mxu0 0.0
        %1921 = vmatpush.msra.mxu0 0.0
        %1922 = vmatpush.msra.mxu0 0.0
        %1923 = vmatpush.msra.mxu0 0.0
        %1924 = vmatpush.msra.mxu0 0.0
        %1925 = vmatpush.msra.mxu0 0.0
        %1926 = vmatpush.msra.mxu0 0.0
        %1927 = vmatpush.msra.mxu0 0.0
        %1928 = vmatpush.msra.mxu0 0.0
        %1929 = vmatpush.msra.mxu0 0.0
        %1930 = vmatpush.msra.mxu0 %v1913
        %1931 = vmatmul.f32.gmra.mxu0 %v1865
        %v1932 = vpop.f32.mrf.mxu0
        %v1933 = vadd.f32 %v1817, %v1932
        %1934 = vmatmul.f32.gmra.mxu0 %v1868
        %v1935 = vpop.f32.mrf.mxu0
        %v1936 = vadd.f32 %v1820, %v1935
        %1937 = vmatmul.f32.gmra.mxu0 %v1871
        %v1938 = vpop.f32.mrf.mxu0
        %v1939 = vadd.f32 %v1823, %v1938
        %1940 = vmatmul.f32.gmra.mxu0 %v1874
        %v1941 = vpop.f32.mrf.mxu0
        %v1942 = vadd.f32 %v1826, %v1941
        %1943 = vmatmul.f32.gmra.mxu0 %v1877
        %v1944 = vpop.f32.mrf.mxu0
        %v1945 = vadd.f32 %v1829, %v1944
        %1946 = vmatmul.f32.gmra.mxu0 %v1880
        %v1947 = vpop.f32.mrf.mxu0
        %v1948 = vadd.f32 %v1832, %v1947
        %1949 = vmatmul.f32.gmra.mxu0 %v1883
        %v1950 = vpop.f32.mrf.mxu0
        %v1951 = vadd.f32 %v1835, %v1950
        %1952 = vmatmul.f32.gmra.mxu0 %v1886
        %v1953 = vpop.f32.mrf.mxu0
        %v1954 = vadd.f32 %v1838, %v1953
        %1955 = vmatmul.f32.gmra.mxu0 %v1889
        %v1956 = vpop.f32.mrf.mxu0
        %v1957 = vadd.f32 %v1841, %v1956
        %1958 = vmatmul.f32.gmra.mxu0 %v1892
        %v1959 = vpop.f32.mrf.mxu0
        %v1960 = vadd.f32 %v1844, %v1959
        %1961 = vmatmul.f32.gmra.mxu0 %v1895
        %v1962 = vpop.f32.mrf.mxu0
        %v1963 = vadd.f32 %v1847, %v1962
        %1964 = vmatmul.f32.gmra.mxu0 %v1898
        %v1965 = vpop.f32.mrf.mxu0
        %v1966 = vadd.f32 %v1850, %v1965
        %1967 = vmatmul.f32.gmra.mxu0 %v1901
        %v1968 = vpop.f32.mrf.mxu0
        %v1969 = vadd.f32 %v1853, %v1968
        %1970 = vmatmul.f32.gmra.mxu0 %v1904
        %v1971 = vpop.f32.mrf.mxu0
        %v1972 = vadd.f32 %v1856, %v1971
        %1973 = vmatmul.f32.gmra.mxu0 %v1907
        %v1974 = vpop.f32.mrf.mxu0
        %v1975 = vadd.f32 %v1859, %v1974
        %1976 = vmatmul.f32.gmra.mxu0 %v1910
        %v1977 = vpop.f32.mrf.mxu0
        %v1978 = vadd.f32 %v1862, %v1977
        %1979 = vdwg.mxu0
        %1980 = vst.msk [vmem:[%s325] sm:$0xff] %vm1476, %v1933
        %1981 = vst.msk [vmem:[%s325 + $0x8] sm:$0xff] %vm1476, %v1936
        %1982 = vst.msk [vmem:[%s325 + $0x10] sm:$0xff] %vm1476, %v1939
        %1983 = vst.msk [vmem:[%s325 + $0x18] sm:$0xff] %vm1476, %v1942
        %1984 = vst.msk [vmem:[%s325 + $0x20] sm:$0xff] %vm1476, %v1945
        %1985 = vst.msk [vmem:[%s325 + $0x28] sm:$0xff] %vm1476, %v1948
        %1986 = vst.msk [vmem:[%s325 + $0x30] sm:$0xff] %vm1476, %v1951
        %1987 = vst.msk [vmem:[%s325 + $0x38] sm:$0xff] %vm1476, %v1954
        %1988 = vst.msk [vmem:[%s325 + $0x40] sm:$0xff] %vm1476, %v1957
        %1989 = vst.msk [vmem:[%s325 + $0x48] sm:$0xff] %vm1476, %v1960
        %1990 = vst.msk [vmem:[%s325 + $0x50] sm:$0xff] %vm1476, %v1963
        %1991 = vst.msk [vmem:[%s325 + $0x58] sm:$0xff] %vm1476, %v1966
        %1992 = vst.msk [vmem:[%s325 + $0x60] sm:$0xff] %vm1476, %v1969
        %1993 = vst.msk [vmem:[%s325 + $0x68] sm:$0xff] %vm1476, %v1972
        %1994 = vst.msk [vmem:[%s325 + $0x70] sm:$0xff] %vm1476, %v1975
        %1995 = vst.msk [vmem:[%s325 + $0x78] sm:$0xff] %vm1476, %v1978
        %s1996 = scalar_lea.vmem [#allocation2], 192
        %v1997 = vld [vmem:[%s1996] sm:$0xff]
        %v1998 = vld [vmem:[%s1996 + $0x8] sm:$0xff]
        %v1999 = vld [vmem:[%s1996 + $0x18] sm:$0xff]
        %v2000 = vld [vmem:[%s1996 + $0x20] sm:$0xff]
        %v2001 = vld [vmem:[%s1996 + $0x30] sm:$0xff]
        %v2002 = vld [vmem:[%s1996 + $0x38] sm:$0xff]
        %v2003 = vld [vmem:[%s1996 + $0x48] sm:$0xff]
        %v2004 = vld [vmem:[%s1996 + $0x50] sm:$0xff]
        %v2005 = vld [vmem:[%s1996 + $0x60] sm:$0xff]
        %v2006 = vld [vmem:[%s1996 + $0x68] sm:$0xff]
        %v2007 = vld [vmem:[%s1996 + $0x78] sm:$0xff]
        %v2008 = vld [vmem:[%s1996 + $0x80] sm:$0xff]
        %v2009 = vld [vmem:[%s1996 + $0x90] sm:$0xff]
        %v2010 = vld [vmem:[%s1996 + $0x98] sm:$0xff]
        %v2011 = vld [vmem:[%s1996 + $0xa8] sm:$0xff]
        %v2012 = vld [vmem:[%s1996 + $0xb0] sm:$0xff]
        %v2013 = vld [vmem:[%s1996 + $0x1] sm:$0xff]
        %v2014 = vld [vmem:[%s1996 + $0x9] sm:$0xff]
        %v2015 = vld [vmem:[%s1996 + $0x19] sm:$0xff]
        %v2016 = vld [vmem:[%s1996 + $0x21] sm:$0xff]
        %v2017 = vld [vmem:[%s1996 + $0x31] sm:$0xff]
        %v2018 = vld [vmem:[%s1996 + $0x39] sm:$0xff]
        %v2019 = vld [vmem:[%s1996 + $0x49] sm:$0xff]
        %v2020 = vld [vmem:[%s1996 + $0x51] sm:$0xff]
        %v2021 = vld [vmem:[%s1996 + $0x61] sm:$0xff]
        %v2022 = vld [vmem:[%s1996 + $0x69] sm:$0xff]
        %v2023 = vld [vmem:[%s1996 + $0x79] sm:$0xff]
        %v2024 = vld [vmem:[%s1996 + $0x81] sm:$0xff]
        %v2025 = vld [vmem:[%s1996 + $0x91] sm:$0xff]
        %v2026 = vld [vmem:[%s1996 + $0x99] sm:$0xff]
        %v2027 = vld [vmem:[%s1996 + $0xa9] sm:$0xff]
        %v2028 = vld [vmem:[%s1996 + $0xb1] sm:$0xff]
        %v2029 = vld [vmem:[%s1996 + $0x2] sm:$0xff]
        %v2030 = vld [vmem:[%s1996 + $0xa] sm:$0xff]
        %v2031 = vld [vmem:[%s1996 + $0x1a] sm:$0xff]
        %v2032 = vld [vmem:[%s1996 + $0x22] sm:$0xff]
        %v2033 = vld [vmem:[%s1996 + $0x32] sm:$0xff]
        %v2034 = vld [vmem:[%s1996 + $0x3a] sm:$0xff]
        %v2035 = vld [vmem:[%s1996 + $0x4a] sm:$0xff]
        %v2036 = vld [vmem:[%s1996 + $0x52] sm:$0xff]
        %v2037 = vld [vmem:[%s1996 + $0x62] sm:$0xff]
        %v2038 = vld [vmem:[%s1996 + $0x6a] sm:$0xff]
        %v2039 = vld [vmem:[%s1996 + $0x7a] sm:$0xff]
        %v2040 = vld [vmem:[%s1996 + $0x82] sm:$0xff]
        %v2041 = vld [vmem:[%s1996 + $0x92] sm:$0xff]
        %v2042 = vld [vmem:[%s1996 + $0x9a] sm:$0xff]
        %v2043 = vld [vmem:[%s1996 + $0xaa] sm:$0xff]
        %v2044 = vld [vmem:[%s1996 + $0xb2] sm:$0xff]
        %s2045 = scalar_lea.vmem [#allocation2], 216
        %v2046 = vld [vmem:[%s2045] sm:$0xff]
        %v2047 = vld [vmem:[%s2045 + $0x8] sm:$0xff]
        %v2048 = vld [vmem:[%s2045 + $0x18] sm:$0xff]
        %v2049 = vld [vmem:[%s2045 + $0x20] sm:$0xff]
        %v2050 = vld [vmem:[%s2045 + $0x30] sm:$0xff]
        %v2051 = vld [vmem:[%s2045 + $0x38] sm:$0xff]
        %v2052 = vld [vmem:[%s2045 + $0x48] sm:$0xff]
        %v2053 = vld [vmem:[%s2045 + $0x50] sm:$0xff]
        %v2054 = vld [vmem:[%s2045 + $0x60] sm:$0xff]
        %v2055 = vld [vmem:[%s2045 + $0x68] sm:$0xff]
        %v2056 = vld [vmem:[%s2045 + $0x78] sm:$0xff]
        %v2057 = vld [vmem:[%s2045 + $0x80] sm:$0xff]
        %v2058 = vld [vmem:[%s2045 + $0x90] sm:$0xff]
        %v2059 = vld [vmem:[%s2045 + $0x98] sm:$0xff]
        %v2060 = vld [vmem:[%s2045 + $0xa8] sm:$0xff]
        %v2061 = vld [vmem:[%s2045 + $0xb0] sm:$0xff]
        %v2062 = vld [vmem:[%s2045 + $0x1] sm:$0xff]
        %v2063 = vld [vmem:[%s2045 + $0x9] sm:$0xff]
        %v2064 = vld [vmem:[%s2045 + $0x19] sm:$0xff]
        %v2065 = vld [vmem:[%s2045 + $0x21] sm:$0xff]
        %v2066 = vld [vmem:[%s2045 + $0x31] sm:$0xff]
        %v2067 = vld [vmem:[%s2045 + $0x39] sm:$0xff]
        %v2068 = vld [vmem:[%s2045 + $0x49] sm:$0xff]
        %v2069 = vld [vmem:[%s2045 + $0x51] sm:$0xff]
        %v2070 = vld [vmem:[%s2045 + $0x61] sm:$0xff]
        %v2071 = vld [vmem:[%s2045 + $0x69] sm:$0xff]
        %v2072 = vld [vmem:[%s2045 + $0x79] sm:$0xff]
        %v2073 = vld [vmem:[%s2045 + $0x81] sm:$0xff]
        %v2074 = vld [vmem:[%s2045 + $0x91] sm:$0xff]
        %v2075 = vld [vmem:[%s2045 + $0x99] sm:$0xff]
        %v2076 = vld [vmem:[%s2045 + $0xa9] sm:$0xff]
        %v2077 = vld [vmem:[%s2045 + $0xb1] sm:$0xff]
        %v2078 = vld [vmem:[%s2045 + $0x2] sm:$0xff]
        %v2079 = vld [vmem:[%s2045 + $0xa] sm:$0xff]
        %v2080 = vld [vmem:[%s2045 + $0x1a] sm:$0xff]
        %v2081 = vld [vmem:[%s2045 + $0x22] sm:$0xff]
        %v2082 = vld [vmem:[%s2045 + $0x32] sm:$0xff]
        %v2083 = vld [vmem:[%s2045 + $0x3a] sm:$0xff]
        %v2084 = vld [vmem:[%s2045 + $0x4a] sm:$0xff]
        %v2085 = vld [vmem:[%s2045 + $0x52] sm:$0xff]
        %v2086 = vld [vmem:[%s2045 + $0x62] sm:$0xff]
        %v2087 = vld [vmem:[%s2045 + $0x6a] sm:$0xff]
        %v2088 = vld [vmem:[%s2045 + $0x7a] sm:$0xff]
        %v2089 = vld [vmem:[%s2045 + $0x82] sm:$0xff]
        %v2090 = vld [vmem:[%s2045 + $0x92] sm:$0xff]
        %v2091 = vld [vmem:[%s2045 + $0x9a] sm:$0xff]
        %v2092 = vld [vmem:[%s2045 + $0xaa] sm:$0xff]
        %v2093 = vld [vmem:[%s2045 + $0xb2] sm:$0xff]
        %s2094 = scalar_lea.vmem [#allocation2], 240
        %v2095 = vld [vmem:[%s2094] sm:$0xff]
        %v2096 = vld [vmem:[%s2094 + $0x8] sm:$0xff]
        %v2097 = vld [vmem:[%s2094 + $0x18] sm:$0xff]
        %v2098 = vld [vmem:[%s2094 + $0x20] sm:$0xff]
        %v2099 = vld [vmem:[%s2094 + $0x30] sm:$0xff]
        %v2100 = vld [vmem:[%s2094 + $0x38] sm:$0xff]
        %v2101 = vld [vmem:[%s2094 + $0x48] sm:$0xff]
        %v2102 = vld [vmem:[%s2094 + $0x50] sm:$0xff]
        %v2103 = vld [vmem:[%s2094 + $0x60] sm:$0xff]
        %v2104 = vld [vmem:[%s2094 + $0x68] sm:$0xff]
        %v2105 = vld [vmem:[%s2094 + $0x78] sm:$0xff]
        %v2106 = vld [vmem:[%s2094 + $0x80] sm:$0xff]
        %v2107 = vld [vmem:[%s2094 + $0x90] sm:$0xff]
        %v2108 = vld [vmem:[%s2094 + $0x98] sm:$0xff]
        %v2109 = vld [vmem:[%s2094 + $0xa8] sm:$0xff]
        %v2110 = vld [vmem:[%s2094 + $0xb0] sm:$0xff]
        %v2111 = vld [vmem:[%s2094 + $0x1] sm:$0xff]
        %v2112 = vld [vmem:[%s2094 + $0x9] sm:$0xff]
        %v2113 = vld [vmem:[%s2094 + $0x19] sm:$0xff]
        %v2114 = vld [vmem:[%s2094 + $0x21] sm:$0xff]
        %v2115 = vld [vmem:[%s2094 + $0x31] sm:$0xff]
        %v2116 = vld [vmem:[%s2094 + $0x39] sm:$0xff]
        %v2117 = vld [vmem:[%s2094 + $0x49] sm:$0xff]
        %v2118 = vld [vmem:[%s2094 + $0x51] sm:$0xff]
        %v2119 = vld [vmem:[%s2094 + $0x61] sm:$0xff]
        %v2120 = vld [vmem:[%s2094 + $0x69] sm:$0xff]
        %v2121 = vld [vmem:[%s2094 + $0x79] sm:$0xff]
        %v2122 = vld [vmem:[%s2094 + $0x81] sm:$0xff]
        %v2123 = vld [vmem:[%s2094 + $0x91] sm:$0xff]
        %v2124 = vld [vmem:[%s2094 + $0x99] sm:$0xff]
        %v2125 = vld [vmem:[%s2094 + $0xa9] sm:$0xff]
        %v2126 = vld [vmem:[%s2094 + $0xb1] sm:$0xff]
        %v2127 = vld [vmem:[%s2094 + $0x2] sm:$0xff]
        %v2128 = vld [vmem:[%s2094 + $0xa] sm:$0xff]
        %v2129 = vld [vmem:[%s2094 + $0x1a] sm:$0xff]
        %v2130 = vld [vmem:[%s2094 + $0x22] sm:$0xff]
        %v2131 = vld [vmem:[%s2094 + $0x32] sm:$0xff]
        %v2132 = vld [vmem:[%s2094 + $0x3a] sm:$0xff]
        %v2133 = vld [vmem:[%s2094 + $0x4a] sm:$0xff]
        %v2134 = vld [vmem:[%s2094 + $0x52] sm:$0xff]
        %v2135 = vld [vmem:[%s2094 + $0x62] sm:$0xff]
        %v2136 = vld [vmem:[%s2094 + $0x6a] sm:$0xff]
        %v2137 = vld [vmem:[%s2094 + $0x7a] sm:$0xff]
        %v2138 = vld [vmem:[%s2094 + $0x82] sm:$0xff]
        %v2139 = vld [vmem:[%s2094 + $0x92] sm:$0xff]
        %v2140 = vld [vmem:[%s2094 + $0x9a] sm:$0xff]
        %v2141 = vld [vmem:[%s2094 + $0xaa] sm:$0xff]
        %v2142 = vld [vmem:[%s2094 + $0xb2] sm:$0xff]
        %2159 = vrot.lane.b32.xlu0 %v2013, 4
        %v2160 = vpop.permute.xlu0 %2159
        %2161 = vrot.lane.b32.xlu0 %v2014, 4
        %v2162 = vpop.permute.xlu0 %2161
        %2163 = vrot.lane.b32.xlu0 %v2015, 4
        %v2164 = vpop.permute.xlu0 %2163
        %2165 = vrot.lane.b32.xlu0 %v2016, 4
        %v2166 = vpop.permute.xlu0 %2165
        %2167 = vrot.lane.b32.xlu0 %v2017, 4
        %v2168 = vpop.permute.xlu0 %2167
        %2169 = vrot.lane.b32.xlu0 %v2018, 4
        %v2170 = vpop.permute.xlu0 %2169
        %2171 = vrot.lane.b32.xlu0 %v2019, 4
        %v2172 = vpop.permute.xlu0 %2171
        %2173 = vrot.lane.b32.xlu0 %v2020, 4
        %v2174 = vpop.permute.xlu0 %2173
        %2175 = vrot.lane.b32.xlu0 %v2021, 4
        %v2176 = vpop.permute.xlu0 %2175
        %2177 = vrot.lane.b32.xlu0 %v2022, 4
        %v2178 = vpop.permute.xlu0 %2177
        %2179 = vrot.lane.b32.xlu0 %v2023, 4
        %v2180 = vpop.permute.xlu0 %2179
        %2181 = vrot.lane.b32.xlu0 %v2024, 4
        %v2182 = vpop.permute.xlu0 %2181
        %2183 = vrot.lane.b32.xlu0 %v2025, 4
        %v2184 = vpop.permute.xlu0 %2183
        %2185 = vrot.lane.b32.xlu0 %v2026, 4
        %v2186 = vpop.permute.xlu0 %2185
        %2187 = vrot.lane.b32.xlu0 %v2027, 4
        %v2188 = vpop.permute.xlu0 %2187
        %2189 = vrot.lane.b32.xlu0 %v2028, 4
        %v2190 = vpop.permute.xlu0 %2189
        %2223 = vrot.lane.b32.xlu0 %v2029, 8
        %v2224 = vpop.permute.xlu0 %2223
        %2225 = vrot.lane.b32.xlu0 %v2030, 8
        %v2226 = vpop.permute.xlu0 %2225
        %2227 = vrot.lane.b32.xlu0 %v2031, 8
        %v2228 = vpop.permute.xlu0 %2227
        %2229 = vrot.lane.b32.xlu0 %v2032, 8
        %v2230 = vpop.permute.xlu0 %2229
        %2231 = vrot.lane.b32.xlu0 %v2033, 8
        %v2232 = vpop.permute.xlu0 %2231
        %2233 = vrot.lane.b32.xlu0 %v2034, 8
        %v2234 = vpop.permute.xlu0 %2233
        %2235 = vrot.lane.b32.xlu0 %v2035, 8
        %v2236 = vpop.permute.xlu0 %2235
        %2237 = vrot.lane.b32.xlu0 %v2036, 8
        %v2238 = vpop.permute.xlu0 %2237
        %2239 = vrot.lane.b32.xlu0 %v2037, 8
        %v2240 = vpop.permute.xlu0 %2239
        %2241 = vrot.lane.b32.xlu0 %v2038, 8
        %v2242 = vpop.permute.xlu0 %2241
        %2243 = vrot.lane.b32.xlu0 %v2039, 8
        %v2244 = vpop.permute.xlu0 %2243
        %2245 = vrot.lane.b32.xlu0 %v2040, 8
        %v2246 = vpop.permute.xlu0 %2245
        %2247 = vrot.lane.b32.xlu0 %v2041, 8
        %v2248 = vpop.permute.xlu0 %2247
        %2249 = vrot.lane.b32.xlu0 %v2042, 8
        %v2250 = vpop.permute.xlu0 %2249
        %2251 = vrot.lane.b32.xlu0 %v2043, 8
        %v2252 = vpop.permute.xlu0 %2251
        %2253 = vrot.lane.b32.xlu0 %v2044, 8
        %v2254 = vpop.permute.xlu0 %2253
        %2287 = vrot.lane.b32.xlu0 %v2046, 12
        %v2288 = vpop.permute.xlu0 %2287
        %2289 = vrot.lane.b32.xlu0 %v2047, 12
        %v2290 = vpop.permute.xlu0 %2289
        %2291 = vrot.lane.b32.xlu0 %v2048, 12
        %v2292 = vpop.permute.xlu0 %2291
        %2293 = vrot.lane.b32.xlu0 %v2049, 12
        %v2294 = vpop.permute.xlu0 %2293
        %2295 = vrot.lane.b32.xlu0 %v2050, 12
        %v2296 = vpop.permute.xlu0 %2295
        %2297 = vrot.lane.b32.xlu0 %v2051, 12
        %v2298 = vpop.permute.xlu0 %2297
        %2299 = vrot.lane.b32.xlu0 %v2052, 12
        %v2300 = vpop.permute.xlu0 %2299
        %2301 = vrot.lane.b32.xlu0 %v2053, 12
        %v2302 = vpop.permute.xlu0 %2301
        %2303 = vrot.lane.b32.xlu0 %v2054, 12
        %v2304 = vpop.permute.xlu0 %2303
        %2305 = vrot.lane.b32.xlu0 %v2055, 12
        %v2306 = vpop.permute.xlu0 %2305
        %2307 = vrot.lane.b32.xlu0 %v2056, 12
        %v2308 = vpop.permute.xlu0 %2307
        %2309 = vrot.lane.b32.xlu0 %v2057, 12
        %v2310 = vpop.permute.xlu0 %2309
        %2311 = vrot.lane.b32.xlu0 %v2058, 12
        %v2312 = vpop.permute.xlu0 %2311
        %2313 = vrot.lane.b32.xlu0 %v2059, 12
        %v2314 = vpop.permute.xlu0 %2313
        %2315 = vrot.lane.b32.xlu0 %v2060, 12
        %v2316 = vpop.permute.xlu0 %2315
        %2317 = vrot.lane.b32.xlu0 %v2061, 12
        %v2318 = vpop.permute.xlu0 %2317
        %2351 = vrot.lane.b32.xlu0 %v2062, 16
        %v2352 = vpop.permute.xlu0 %2351
        %2353 = vrot.lane.b32.xlu0 %v2063, 16
        %v2354 = vpop.permute.xlu0 %2353
        %2355 = vrot.lane.b32.xlu0 %v2064, 16
        %v2356 = vpop.permute.xlu0 %2355
        %2357 = vrot.lane.b32.xlu0 %v2065, 16
        %v2358 = vpop.permute.xlu0 %2357
        %2359 = vrot.lane.b32.xlu0 %v2066, 16
        %v2360 = vpop.permute.xlu0 %2359
        %2361 = vrot.lane.b32.xlu0 %v2067, 16
        %v2362 = vpop.permute.xlu0 %2361
        %2363 = vrot.lane.b32.xlu0 %v2068, 16
        %v2364 = vpop.permute.xlu0 %2363
        %2365 = vrot.lane.b32.xlu0 %v2069, 16
        %v2366 = vpop.permute.xlu0 %2365
        %2367 = vrot.lane.b32.xlu0 %v2070, 16
        %v2368 = vpop.permute.xlu0 %2367
        %2369 = vrot.lane.b32.xlu0 %v2071, 16
        %v2370 = vpop.permute.xlu0 %2369
        %2371 = vrot.lane.b32.xlu0 %v2072, 16
        %v2372 = vpop.permute.xlu0 %2371
        %2373 = vrot.lane.b32.xlu0 %v2073, 16
        %v2374 = vpop.permute.xlu0 %2373
        %2375 = vrot.lane.b32.xlu0 %v2074, 16
        %v2376 = vpop.permute.xlu0 %2375
        %2377 = vrot.lane.b32.xlu0 %v2075, 16
        %v2378 = vpop.permute.xlu0 %2377
        %2379 = vrot.lane.b32.xlu0 %v2076, 16
        %v2380 = vpop.permute.xlu0 %2379
        %2381 = vrot.lane.b32.xlu0 %v2077, 16
        %v2382 = vpop.permute.xlu0 %2381
        %2415 = vrot.lane.b32.xlu0 %v2078, 20
        %v2416 = vpop.permute.xlu0 %2415
        %2417 = vrot.lane.b32.xlu0 %v2079, 20
        %v2418 = vpop.permute.xlu0 %2417
        %2419 = vrot.lane.b32.xlu0 %v2080, 20
        %v2420 = vpop.permute.xlu0 %2419
        %2421 = vrot.lane.b32.xlu0 %v2081, 20
        %v2422 = vpop.permute.xlu0 %2421
        %2423 = vrot.lane.b32.xlu0 %v2082, 20
        %v2424 = vpop.permute.xlu0 %2423
        %2425 = vrot.lane.b32.xlu0 %v2083, 20
        %v2426 = vpop.permute.xlu0 %2425
        %2427 = vrot.lane.b32.xlu0 %v2084, 20
        %v2428 = vpop.permute.xlu0 %2427
        %2429 = vrot.lane.b32.xlu0 %v2085, 20
        %v2430 = vpop.permute.xlu0 %2429
        %2431 = vrot.lane.b32.xlu0 %v2086, 20
        %v2432 = vpop.permute.xlu0 %2431
        %2433 = vrot.lane.b32.xlu0 %v2087, 20
        %v2434 = vpop.permute.xlu0 %2433
        %2435 = vrot.lane.b32.xlu0 %v2088, 20
        %v2436 = vpop.permute.xlu0 %2435
        %2437 = vrot.lane.b32.xlu0 %v2089, 20
        %v2438 = vpop.permute.xlu0 %2437
        %2439 = vrot.lane.b32.xlu0 %v2090, 20
        %v2440 = vpop.permute.xlu0 %2439
        %2441 = vrot.lane.b32.xlu0 %v2091, 20
        %v2442 = vpop.permute.xlu0 %2441
        %2443 = vrot.lane.b32.xlu0 %v2092, 20
        %v2444 = vpop.permute.xlu0 %2443
        %2445 = vrot.lane.b32.xlu0 %v2093, 20
        %v2446 = vpop.permute.xlu0 %2445
        %2479 = vrot.lane.b32.xlu0 %v2095, 24
        %v2480 = vpop.permute.xlu0 %2479
        %2481 = vrot.lane.b32.xlu0 %v2096, 24
        %v2482 = vpop.permute.xlu0 %2481
        %2483 = vrot.lane.b32.xlu0 %v2097, 24
        %v2484 = vpop.permute.xlu0 %2483
        %2485 = vrot.lane.b32.xlu0 %v2098, 24
        %v2486 = vpop.permute.xlu0 %2485
        %2487 = vrot.lane.b32.xlu0 %v2099, 24
        %v2488 = vpop.permute.xlu0 %2487
        %2489 = vrot.lane.b32.xlu0 %v2100, 24
        %v2490 = vpop.permute.xlu0 %2489
        %2491 = vrot.lane.b32.xlu0 %v2101, 24
        %v2492 = vpop.permute.xlu0 %2491
        %2493 = vrot.lane.b32.xlu0 %v2102, 24
        %v2494 = vpop.permute.xlu0 %2493
        %2495 = vrot.lane.b32.xlu0 %v2103, 24
        %v2496 = vpop.permute.xlu0 %2495
        %2497 = vrot.lane.b32.xlu0 %v2104, 24
        %v2498 = vpop.permute.xlu0 %2497
        %2499 = vrot.lane.b32.xlu0 %v2105, 24
        %v2500 = vpop.permute.xlu0 %2499
        %2501 = vrot.lane.b32.xlu0 %v2106, 24
        %v2502 = vpop.permute.xlu0 %2501
        %2503 = vrot.lane.b32.xlu0 %v2107, 24
        %v2504 = vpop.permute.xlu0 %2503
        %2505 = vrot.lane.b32.xlu0 %v2108, 24
        %v2506 = vpop.permute.xlu0 %2505
        %2507 = vrot.lane.b32.xlu0 %v2109, 24
        %v2508 = vpop.permute.xlu0 %2507
        %2509 = vrot.lane.b32.xlu0 %v2110, 24
        %v2510 = vpop.permute.xlu0 %2509
        %2543 = vrot.lane.b32.xlu0 %v2111, 28
        %v2544 = vpop.permute.xlu0 %2543
        %2545 = vrot.lane.b32.xlu0 %v2112, 28
        %v2546 = vpop.permute.xlu0 %2545
        %2547 = vrot.lane.b32.xlu0 %v2113, 28
        %v2548 = vpop.permute.xlu0 %2547
        %2549 = vrot.lane.b32.xlu0 %v2114, 28
        %v2550 = vpop.permute.xlu0 %2549
        %2551 = vrot.lane.b32.xlu0 %v2115, 28
        %v2552 = vpop.permute.xlu0 %2551
        %2553 = vrot.lane.b32.xlu0 %v2116, 28
        %v2554 = vpop.permute.xlu0 %2553
        %2555 = vrot.lane.b32.xlu0 %v2117, 28
        %v2556 = vpop.permute.xlu0 %2555
        %2557 = vrot.lane.b32.xlu0 %v2118, 28
        %v2558 = vpop.permute.xlu0 %2557
        %2559 = vrot.lane.b32.xlu0 %v2119, 28
        %v2560 = vpop.permute.xlu0 %2559
        %2561 = vrot.lane.b32.xlu0 %v2120, 28
        %v2562 = vpop.permute.xlu0 %2561
        %2563 = vrot.lane.b32.xlu0 %v2121, 28
        %v2564 = vpop.permute.xlu0 %2563
        %2565 = vrot.lane.b32.xlu0 %v2122, 28
        %v2566 = vpop.permute.xlu0 %2565
        %2567 = vrot.lane.b32.xlu0 %v2123, 28
        %v2568 = vpop.permute.xlu0 %2567
        %2569 = vrot.lane.b32.xlu0 %v2124, 28
        %v2570 = vpop.permute.xlu0 %2569
        %2571 = vrot.lane.b32.xlu0 %v2125, 28
        %v2572 = vpop.permute.xlu0 %2571
        %2573 = vrot.lane.b32.xlu0 %v2126, 28
        %v2574 = vpop.permute.xlu0 %2573
        %2607 = vrot.lane.b32.xlu0 %v2127, 32
        %v2608 = vpop.permute.xlu0 %2607
        %2609 = vrot.lane.b32.xlu0 %v2128, 32
        %v2610 = vpop.permute.xlu0 %2609
        %2611 = vrot.lane.b32.xlu0 %v2129, 32
        %v2612 = vpop.permute.xlu0 %2611
        %2613 = vrot.lane.b32.xlu0 %v2130, 32
        %v2614 = vpop.permute.xlu0 %2613
        %2615 = vrot.lane.b32.xlu0 %v2131, 32
        %v2616 = vpop.permute.xlu0 %2615
        %2617 = vrot.lane.b32.xlu0 %v2132, 32
        %v2618 = vpop.permute.xlu0 %2617
        %2619 = vrot.lane.b32.xlu0 %v2133, 32
        %v2620 = vpop.permute.xlu0 %2619
        %2621 = vrot.lane.b32.xlu0 %v2134, 32
        %v2622 = vpop.permute.xlu0 %2621
        %2623 = vrot.lane.b32.xlu0 %v2135, 32
        %v2624 = vpop.permute.xlu0 %2623
        %2625 = vrot.lane.b32.xlu0 %v2136, 32
        %v2626 = vpop.permute.xlu0 %2625
        %2627 = vrot.lane.b32.xlu0 %v2137, 32
        %v2628 = vpop.permute.xlu0 %2627
        %2629 = vrot.lane.b32.xlu0 %v2138, 32
        %v2630 = vpop.permute.xlu0 %2629
        %2631 = vrot.lane.b32.xlu0 %v2139, 32
        %v2632 = vpop.permute.xlu0 %2631
        %2633 = vrot.lane.b32.xlu0 %v2140, 32
        %v2634 = vpop.permute.xlu0 %2633
        %2635 = vrot.lane.b32.xlu0 %v2141, 32
        %v2636 = vpop.permute.xlu0 %2635
        %2637 = vrot.lane.b32.xlu0 %v2142, 32
        %v2638 = vpop.permute.xlu0 %2637
        %v2655 = vsel %vm343, %v1997, %v2160
        %v2656 = vsel %vm343, %v1998, %v2162
        %v2657 = vsel %vm343, %v1999, %v2164
        %v2658 = vsel %vm343, %v2000, %v2166
        %v2659 = vsel %vm343, %v2001, %v2168
        %v2660 = vsel %vm343, %v2002, %v2170
        %v2661 = vsel %vm343, %v2003, %v2172
        %v2662 = vsel %vm343, %v2004, %v2174
        %v2663 = vsel %vm343, %v2005, %v2176
        %v2664 = vsel %vm343, %v2006, %v2178
        %v2665 = vsel %vm343, %v2007, %v2180
        %v2666 = vsel %vm343, %v2008, %v2182
        %v2667 = vsel %vm343, %v2009, %v2184
        %v2668 = vsel %vm343, %v2010, %v2186
        %v2669 = vsel %vm343, %v2011, %v2188
        %v2670 = vsel %vm343, %v2012, %v2190
        %v2671 = vsel %vm1442, %v2655, %v2224
        %v2672 = vsel %vm1442, %v2656, %v2226
        %v2673 = vsel %vm1442, %v2657, %v2228
        %v2674 = vsel %vm1442, %v2658, %v2230
        %v2675 = vsel %vm1442, %v2659, %v2232
        %v2676 = vsel %vm1442, %v2660, %v2234
        %v2677 = vsel %vm1442, %v2661, %v2236
        %v2678 = vsel %vm1442, %v2662, %v2238
        %v2679 = vsel %vm1442, %v2663, %v2240
        %v2680 = vsel %vm1442, %v2664, %v2242
        %v2681 = vsel %vm1442, %v2665, %v2244
        %v2682 = vsel %vm1442, %v2666, %v2246
        %v2683 = vsel %vm1442, %v2667, %v2248
        %v2684 = vsel %vm1442, %v2668, %v2250
        %v2685 = vsel %vm1442, %v2669, %v2252
        %v2686 = vsel %vm1442, %v2670, %v2254
        %v2687 = vsel %vm1459, %v2671, %v2288
        %v2688 = vsel %vm1459, %v2672, %v2290
        %v2689 = vsel %vm1459, %v2673, %v2292
        %v2690 = vsel %vm1459, %v2674, %v2294
        %v2691 = vsel %vm1459, %v2675, %v2296
        %v2692 = vsel %vm1459, %v2676, %v2298
        %v2693 = vsel %vm1459, %v2677, %v2300
        %v2694 = vsel %vm1459, %v2678, %v2302
        %v2695 = vsel %vm1459, %v2679, %v2304
        %v2696 = vsel %vm1459, %v2680, %v2306
        %v2697 = vsel %vm1459, %v2681, %v2308
        %v2698 = vsel %vm1459, %v2682, %v2310
        %v2699 = vsel %vm1459, %v2683, %v2312
        %v2700 = vsel %vm1459, %v2684, %v2314
        %v2701 = vsel %vm1459, %v2685, %v2316
        %v2702 = vsel %vm1459, %v2686, %v2318
        %v2703 = vsel %vm1476, %v2687, %v2352
        %v2704 = vsel %vm1476, %v2688, %v2354
        %v2705 = vsel %vm1476, %v2689, %v2356
        %v2706 = vsel %vm1476, %v2690, %v2358
        %v2707 = vsel %vm1476, %v2691, %v2360
        %v2708 = vsel %vm1476, %v2692, %v2362
        %v2709 = vsel %vm1476, %v2693, %v2364
        %v2710 = vsel %vm1476, %v2694, %v2366
        %v2711 = vsel %vm1476, %v2695, %v2368
        %v2712 = vsel %vm1476, %v2696, %v2370
        %v2713 = vsel %vm1476, %v2697, %v2372
        %v2714 = vsel %vm1476, %v2698, %v2374
        %v2715 = vsel %vm1476, %v2699, %v2376
        %v2716 = vsel %vm1476, %v2700, %v2378
        %v2717 = vsel %vm1476, %v2701, %v2380
        %v2718 = vsel %vm1476, %v2702, %v2382
        %v2719 = vsel %vm1493, %v2703, %v2416
        %v2720 = vsel %vm1493, %v2704, %v2418
        %v2721 = vsel %vm1493, %v2705, %v2420
        %v2722 = vsel %vm1493, %v2706, %v2422
        %v2723 = vsel %vm1493, %v2707, %v2424
        %v2724 = vsel %vm1493, %v2708, %v2426
        %v2725 = vsel %vm1493, %v2709, %v2428
        %v2726 = vsel %vm1493, %v2710, %v2430
        %v2727 = vsel %vm1493, %v2711, %v2432
        %v2728 = vsel %vm1493, %v2712, %v2434
        %v2729 = vsel %vm1493, %v2713, %v2436
        %v2730 = vsel %vm1493, %v2714, %v2438
        %v2731 = vsel %vm1493, %v2715, %v2440
        %v2732 = vsel %vm1493, %v2716, %v2442
        %v2733 = vsel %vm1493, %v2717, %v2444
        %v2734 = vsel %vm1493, %v2718, %v2446
        %v2735 = vsel %vm1510, %v2719, %v2480
        %v2736 = vsel %vm1510, %v2720, %v2482
        %v2737 = vsel %vm1510, %v2721, %v2484
        %v2738 = vsel %vm1510, %v2722, %v2486
        %v2739 = vsel %vm1510, %v2723, %v2488
        %v2740 = vsel %vm1510, %v2724, %v2490
        %v2741 = vsel %vm1510, %v2725, %v2492
        %v2742 = vsel %vm1510, %v2726, %v2494
        %v2743 = vsel %vm1510, %v2727, %v2496
        %v2744 = vsel %vm1510, %v2728, %v2498
        %v2745 = vsel %vm1510, %v2729, %v2500
        %v2746 = vsel %vm1510, %v2730, %v2502
        %v2747 = vsel %vm1510, %v2731, %v2504
        %v2748 = vsel %vm1510, %v2732, %v2506
        %v2749 = vsel %vm1510, %v2733, %v2508
        %v2750 = vsel %vm1510, %v2734, %v2510
        %v2751 = vsel %vm1527, %v2735, %v2544
        %v2752 = vsel %vm1527, %v2736, %v2546
        %v2753 = vsel %vm1527, %v2737, %v2548
        %v2754 = vsel %vm1527, %v2738, %v2550
        %v2755 = vsel %vm1527, %v2739, %v2552
        %v2756 = vsel %vm1527, %v2740, %v2554
        %v2757 = vsel %vm1527, %v2741, %v2556
        %v2758 = vsel %vm1527, %v2742, %v2558
        %v2759 = vsel %vm1527, %v2743, %v2560
        %v2760 = vsel %vm1527, %v2744, %v2562
        %v2761 = vsel %vm1527, %v2745, %v2564
        %v2762 = vsel %vm1527, %v2746, %v2566
        %v2763 = vsel %vm1527, %v2747, %v2568
        %v2764 = vsel %vm1527, %v2748, %v2570
        %v2765 = vsel %vm1527, %v2749, %v2572
        %v2766 = vsel %vm1527, %v2750, %v2574
        %v2767 = vsel %vm1544, %v2751, %v2608
        %v2768 = vsel %vm1544, %v2752, %v2610
        %v2769 = vsel %vm1544, %v2753, %v2612
        %v2770 = vsel %vm1544, %v2754, %v2614
        %v2771 = vsel %vm1544, %v2755, %v2616
        %v2772 = vsel %vm1544, %v2756, %v2618
        %v2773 = vsel %vm1544, %v2757, %v2620
        %v2774 = vsel %vm1544, %v2758, %v2622
        %v2775 = vsel %vm1544, %v2759, %v2624
        %v2776 = vsel %vm1544, %v2760, %v2626
        %v2777 = vsel %vm1544, %v2761, %v2628
        %v2778 = vsel %vm1544, %v2762, %v2630
        %v2779 = vsel %vm1544, %v2763, %v2632
        %v2780 = vsel %vm1544, %v2764, %v2634
        %v2781 = vsel %vm1544, %v2765, %v2636
        %v2782 = vsel %vm1544, %v2766, %v2638
        %v2784 = vsel %vm1561, %v2767, 0
        %v2787 = vsel %vm1561, %v2768, 0
        %v2790 = vsel %vm1561, %v2769, 0
        %v2793 = vsel %vm1561, %v2770, 0
        %v2796 = vsel %vm1561, %v2771, 0
        %v2799 = vsel %vm1561, %v2772, 0
        %v2802 = vsel %vm1561, %v2773, 0
        %v2805 = vsel %vm1561, %v2774, 0
        %v2808 = vsel %vm1561, %v2775, 0
        %v2811 = vsel %vm1561, %v2776, 0
        %v2814 = vsel %vm1561, %v2777, 0
        %v2817 = vsel %vm1561, %v2778, 0
        %v2820 = vsel %vm1561, %v2779, 0
        %v2823 = vsel %vm1561, %v2780, 0
        %v2826 = vsel %vm1561, %v2781, 0
        %v2829 = vsel %vm1561, %v2782, 0
        %2831 = vmatpush.msra.mxu0 0.0
        %2832 = vmatpush.msra.mxu0 0.0
        %2833 = vmatpush.msra.mxu0 0.0
        %2834 = vmatpush.msra.mxu0 0.0
        %2835 = vmatpush.msra.mxu0 0.0
        %2836 = vmatpush.msra.mxu0 0.0
        %2837 = vmatpush.msra.mxu0 0.0
        %2838 = vmatpush.msra.mxu0 0.0
        %2839 = vmatpush.msra.mxu0 0.0
        %2840 = vmatpush.msra.mxu0 0.0
        %2841 = vmatpush.msra.mxu0 0.0
        %2842 = vmatpush.msra.mxu0 %v1611
        %2843 = vmatpush.msra.mxu0 %v337
        %2844 = vmatpush.msra.mxu0 %v336
        %2845 = vmatpush.msra.mxu0 %v335
        %2846 = vmatpush.msra.mxu0 %v334
        %2847 = vmatmul.f32.gmra.mxu0 %v2784
        %v2848 = vpop.f32.mrf.mxu0
        %v2849 = vadd.f32 0.0, %v2848
        %2850 = vmatmul.f32.gmra.mxu0 %v2787
        %v2851 = vpop.f32.mrf.mxu0
        %v2852 = vadd.f32 0.0, %v2851
        %2853 = vmatmul.f32.gmra.mxu0 %v2790
        %v2854 = vpop.f32.mrf.mxu0
        %v2855 = vadd.f32 0.0, %v2854
        %2856 = vmatmul.f32.gmra.mxu0 %v2793
        %v2857 = vpop.f32.mrf.mxu0
        %v2858 = vadd.f32 0.0, %v2857
        %2859 = vmatmul.f32.gmra.mxu0 %v2796
        %v2860 = vpop.f32.mrf.mxu0
        %v2861 = vadd.f32 0.0, %v2860
        %2862 = vmatmul.f32.gmra.mxu0 %v2799
        %v2863 = vpop.f32.mrf.mxu0
        %v2864 = vadd.f32 0.0, %v2863
        %2865 = vmatmul.f32.gmra.mxu0 %v2802
        %v2866 = vpop.f32.mrf.mxu0
        %v2867 = vadd.f32 0.0, %v2866
        %2868 = vmatmul.f32.gmra.mxu0 %v2805
        %v2869 = vpop.f32.mrf.mxu0
        %v2870 = vadd.f32 0.0, %v2869
        %2871 = vmatmul.f32.gmra.mxu0 %v2808
        %v2872 = vpop.f32.mrf.mxu0
        %v2873 = vadd.f32 0.0, %v2872
        %2874 = vmatmul.f32.gmra.mxu0 %v2811
        %v2875 = vpop.f32.mrf.mxu0
        %v2876 = vadd.f32 0.0, %v2875
        %2877 = vmatmul.f32.gmra.mxu0 %v2814
        %v2878 = vpop.f32.mrf.mxu0
        %v2879 = vadd.f32 0.0, %v2878
        %2880 = vmatmul.f32.gmra.mxu0 %v2817
        %v2881 = vpop.f32.mrf.mxu0
        %v2882 = vadd.f32 0.0, %v2881
        %2883 = vmatmul.f32.gmra.mxu0 %v2820
        %v2884 = vpop.f32.mrf.mxu0
        %v2885 = vadd.f32 0.0, %v2884
        %2886 = vmatmul.f32.gmra.mxu0 %v2823
        %v2887 = vpop.f32.mrf.mxu0
        %v2888 = vadd.f32 0.0, %v2887
        %2889 = vmatmul.f32.gmra.mxu0 %v2826
        %v2890 = vpop.f32.mrf.mxu0
        %v2891 = vadd.f32 0.0, %v2890
        %2892 = vmatmul.f32.gmra.mxu0 %v2829
        %v2893 = vpop.f32.mrf.mxu0
        %v2894 = vadd.f32 0.0, %v2893
        %2895 = vdwg.mxu0
        %v2896 = vmul.f32 %v2849, %v1679
        %v2897 = vmul.f32 %v2852, %v1679
        %v2898 = vmul.f32 %v2855, %v1679
        %v2899 = vmul.f32 %v2858, %v1679
        %v2900 = vmul.f32 %v2861, %v1679
        %v2901 = vmul.f32 %v2864, %v1679
        %v2902 = vmul.f32 %v2867, %v1679
        %v2903 = vmul.f32 %v2870, %v1679
        %v2904 = vmul.f32 %v2873, %v1679
        %v2905 = vmul.f32 %v2876, %v1679
        %v2906 = vmul.f32 %v2879, %v1679
        %v2907 = vmul.f32 %v2882, %v1679
        %v2908 = vmul.f32 %v2885, %v1679
        %v2909 = vmul.f32 %v2888, %v1679
        %v2910 = vmul.f32 %v2891, %v1679
        %v2911 = vmul.f32 %v2894, %v1679
        %v2912 = vadd.f32 %v2896, %v1698
        %v2913 = vadd.f32 %v2897, %v1698
        %v2914 = vadd.f32 %v2898, %v1698
        %v2915 = vadd.f32 %v2899, %v1698
        %v2916 = vadd.f32 %v2900, %v1698
        %v2917 = vadd.f32 %v2901, %v1698
        %v2918 = vadd.f32 %v2902, %v1698
        %v2919 = vadd.f32 %v2903, %v1698
        %v2920 = vadd.f32 %v2904, %v1698
        %v2921 = vadd.f32 %v2905, %v1698
        %v2922 = vadd.f32 %v2906, %v1698
        %v2923 = vadd.f32 %v2907, %v1698
        %v2924 = vadd.f32 %v2908, %v1698
        %v2925 = vadd.f32 %v2909, %v1698
        %v2926 = vadd.f32 %v2910, %v1698
        %v2927 = vadd.f32 %v2911, %v1698
        %v2928 = vmax.f32 %v2912, 0.0
        %v2929 = vmax.f32 %v2913, 0.0
        %v2930 = vmax.f32 %v2914, 0.0
        %v2931 = vmax.f32 %v2915, 0.0
        %v2932 = vmax.f32 %v2916, 0.0
        %v2933 = vmax.f32 %v2917, 0.0
        %v2934 = vmax.f32 %v2918, 0.0
        %v2935 = vmax.f32 %v2919, 0.0
        %v2936 = vmax.f32 %v2920, 0.0
        %v2937 = vmax.f32 %v2921, 0.0
        %v2938 = vmax.f32 %v2922, 0.0
        %v2939 = vmax.f32 %v2923, 0.0
        %v2940 = vmax.f32 %v2924, 0.0
        %v2941 = vmax.f32 %v2925, 0.0
        %v2942 = vmax.f32 %v2926, 0.0
        %v2943 = vmax.f32 %v2927, 0.0
        %s2944 = scalar_lea.vmem %s330, 128
        %v2945 = vld [vmem:[%s2944] sm:$0xff]
        %v2946 = vld [vmem:[%s2944 + $0x8] sm:$0xff]
        %v2947 = vld [vmem:[%s2944 + $0x10] sm:$0xff]
        %v2948 = vld [vmem:[%s2944 + $0x18] sm:$0xff]
        %v2949 = vld [vmem:[%s2944 + $0x20] sm:$0xff]
        %v2950 = vld [vmem:[%s2944 + $0x28] sm:$0xff]
        %v2951 = vld [vmem:[%s2944 + $0x30] sm:$0xff]
        %v2952 = vld [vmem:[%s2944 + $0x38] sm:$0xff]
        %v2953 = vld [vmem:[%s2944 + $0x40] sm:$0xff]
        %v2954 = vld [vmem:[%s2944 + $0x48] sm:$0xff]
        %v2955 = vld [vmem:[%s2944 + $0x50] sm:$0xff]
        %v2956 = vld [vmem:[%s2944 + $0x58] sm:$0xff]
        %v2957 = vld [vmem:[%s2944 + $0x60] sm:$0xff]
        %v2958 = vld [vmem:[%s2944 + $0x68] sm:$0xff]
        %v2959 = vld [vmem:[%s2944 + $0x70] sm:$0xff]
        %v2960 = vld [vmem:[%s2944 + $0x78] sm:$0xff]
        %v2962 = vsel %vm343, %v2945, 0
        %v2965 = vsel %vm343, %v2946, 0
        %v2968 = vsel %vm343, %v2947, 0
        %v2971 = vsel %vm343, %v2948, 0
        %v2974 = vsel %vm343, %v2949, 0
        %v2977 = vsel %vm343, %v2950, 0
        %v2980 = vsel %vm343, %v2951, 0
        %v2983 = vsel %vm343, %v2952, 0
        %v2986 = vsel %vm343, %v2953, 0
        %v2989 = vsel %vm343, %v2954, 0
        %v2992 = vsel %vm343, %v2955, 0
        %v2995 = vsel %vm343, %v2956, 0
        %v2998 = vsel %vm343, %v2957, 0
        %v3001 = vsel %vm343, %v2958, 0
        %v3004 = vsel %vm343, %v2959, 0
        %v3007 = vsel %vm343, %v2960, 0
        %3009 = vmatpush.msra.mxu0 0.0
        %3010 = vmatpush.msra.mxu0 0.0
        %3011 = vmatpush.msra.mxu0 0.0
        %3012 = vmatpush.msra.mxu0 0.0
        %3013 = vmatpush.msra.mxu0 0.0
        %3014 = vmatpush.msra.mxu0 0.0
        %3015 = vmatpush.msra.mxu0 0.0
        %3016 = vmatpush.msra.mxu0 0.0
        %3017 = vmatpush.msra.mxu0 0.0
        %3018 = vmatpush.msra.mxu0 0.0
        %3019 = vmatpush.msra.mxu0 0.0
        %3020 = vmatpush.msra.mxu0 0.0
        %3021 = vmatpush.msra.mxu0 0.0
        %3022 = vmatpush.msra.mxu0 0.0
        %3023 = vmatpush.msra.mxu0 0.0
        %3024 = vmatpush.msra.mxu0 %v1797
        %3025 = vmatmul.f32.gmra.mxu0 %v2962
        %v3026 = vpop.f32.mrf.mxu0
        %v3027 = vadd.f32 0.0, %v3026
        %3028 = vmatmul.f32.gmra.mxu0 %v2965
        %v3029 = vpop.f32.mrf.mxu0
        %v3030 = vadd.f32 0.0, %v3029
        %3031 = vmatmul.f32.gmra.mxu0 %v2968
        %v3032 = vpop.f32.mrf.mxu0
        %v3033 = vadd.f32 0.0, %v3032
        %3034 = vmatmul.f32.gmra.mxu0 %v2971
        %v3035 = vpop.f32.mrf.mxu0
        %v3036 = vadd.f32 0.0, %v3035
        %3037 = vmatmul.f32.gmra.mxu0 %v2974
        %v3038 = vpop.f32.mrf.mxu0
        %v3039 = vadd.f32 0.0, %v3038
        %3040 = vmatmul.f32.gmra.mxu0 %v2977
        %v3041 = vpop.f32.mrf.mxu0
        %v3042 = vadd.f32 0.0, %v3041
        %3043 = vmatmul.f32.gmra.mxu0 %v2980
        %v3044 = vpop.f32.mrf.mxu0
        %v3045 = vadd.f32 0.0, %v3044
        %3046 = vmatmul.f32.gmra.mxu0 %v2983
        %v3047 = vpop.f32.mrf.mxu0
        %v3048 = vadd.f32 0.0, %v3047
        %3049 = vmatmul.f32.gmra.mxu0 %v2986
        %v3050 = vpop.f32.mrf.mxu0
        %v3051 = vadd.f32 0.0, %v3050
        %3052 = vmatmul.f32.gmra.mxu0 %v2989
        %v3053 = vpop.f32.mrf.mxu0
        %v3054 = vadd.f32 0.0, %v3053
        %3055 = vmatmul.f32.gmra.mxu0 %v2992
        %v3056 = vpop.f32.mrf.mxu0
        %v3057 = vadd.f32 0.0, %v3056
        %3058 = vmatmul.f32.gmra.mxu0 %v2995
        %v3059 = vpop.f32.mrf.mxu0
        %v3060 = vadd.f32 0.0, %v3059
        %3061 = vmatmul.f32.gmra.mxu0 %v2998
        %v3062 = vpop.f32.mrf.mxu0
        %v3063 = vadd.f32 0.0, %v3062
        %3064 = vmatmul.f32.gmra.mxu0 %v3001
        %v3065 = vpop.f32.mrf.mxu0
        %v3066 = vadd.f32 0.0, %v3065
        %3067 = vmatmul.f32.gmra.mxu0 %v3004
        %v3068 = vpop.f32.mrf.mxu0
        %v3069 = vadd.f32 0.0, %v3068
        %3070 = vmatmul.f32.gmra.mxu0 %v3007
        %v3071 = vpop.f32.mrf.mxu0
        %v3072 = vadd.f32 0.0, %v3071
        %3073 = vdwg.mxu0
        %v3075 = vsel %vm343, %v2928, 0
        %v3078 = vsel %vm343, %v2929, 0
        %v3081 = vsel %vm343, %v2930, 0
        %v3084 = vsel %vm343, %v2931, 0
        %v3087 = vsel %vm343, %v2932, 0
        %v3090 = vsel %vm343, %v2933, 0
        %v3093 = vsel %vm343, %v2934, 0
        %v3096 = vsel %vm343, %v2935, 0
        %v3099 = vsel %vm343, %v2936, 0
        %v3102 = vsel %vm343, %v2937, 0
        %v3105 = vsel %vm343, %v2938, 0
        %v3108 = vsel %vm343, %v2939, 0
        %v3111 = vsel %vm343, %v2940, 0
        %v3114 = vsel %vm343, %v2941, 0
        %v3117 = vsel %vm343, %v2942, 0
        %v3120 = vsel %vm343, %v2943, 0
        %3122 = vmatpush.msra.mxu0 0.0
        %3123 = vmatpush.msra.mxu0 0.0
        %3124 = vmatpush.msra.mxu0 0.0
        %3125 = vmatpush.msra.mxu0 0.0
        %3126 = vmatpush.msra.mxu0 0.0
        %3127 = vmatpush.msra.mxu0 0.0
        %3128 = vmatpush.msra.mxu0 0.0
        %3129 = vmatpush.msra.mxu0 0.0
        %3130 = vmatpush.msra.mxu0 0.0
        %3131 = vmatpush.msra.mxu0 0.0
        %3132 = vmatpush.msra.mxu0 0.0
        %3133 = vmatpush.msra.mxu0 0.0
        %3134 = vmatpush.msra.mxu0 0.0
        %3135 = vmatpush.msra.mxu0 0.0
        %3136 = vmatpush.msra.mxu0 0.0
        %3137 = vmatpush.msra.mxu0 %v1913
        %3138 = vmatmul.f32.gmra.mxu0 %v3075
        %v3139 = vpop.f32.mrf.mxu0
        %v3140 = vadd.f32 %v3027, %v3139
        %3141 = vmatmul.f32.gmra.mxu0 %v3078
        %v3142 = vpop.f32.mrf.mxu0
        %v3143 = vadd.f32 %v3030, %v3142
        %3144 = vmatmul.f32.gmra.mxu0 %v3081
        %v3145 = vpop.f32.mrf.mxu0
        %v3146 = vadd.f32 %v3033, %v3145
        %3147 = vmatmul.f32.gmra.mxu0 %v3084
        %v3148 = vpop.f32.mrf.mxu0
        %v3149 = vadd.f32 %v3036, %v3148
        %3150 = vmatmul.f32.gmra.mxu0 %v3087
        %v3151 = vpop.f32.mrf.mxu0
        %v3152 = vadd.f32 %v3039, %v3151
        %3153 = vmatmul.f32.gmra.mxu0 %v3090
        %v3154 = vpop.f32.mrf.mxu0
        %v3155 = vadd.f32 %v3042, %v3154
        %3156 = vmatmul.f32.gmra.mxu0 %v3093
        %v3157 = vpop.f32.mrf.mxu0
        %v3158 = vadd.f32 %v3045, %v3157
        %3159 = vmatmul.f32.gmra.mxu0 %v3096
        %v3160 = vpop.f32.mrf.mxu0
        %v3161 = vadd.f32 %v3048, %v3160
        %3162 = vmatmul.f32.gmra.mxu0 %v3099
        %v3163 = vpop.f32.mrf.mxu0
        %v3164 = vadd.f32 %v3051, %v3163
        %3165 = vmatmul.f32.gmra.mxu0 %v3102
        %v3166 = vpop.f32.mrf.mxu0
        %v3167 = vadd.f32 %v3054, %v3166
        %3168 = vmatmul.f32.gmra.mxu0 %v3105
        %v3169 = vpop.f32.mrf.mxu0
        %v3170 = vadd.f32 %v3057, %v3169
        %3171 = vmatmul.f32.gmra.mxu0 %v3108
        %v3172 = vpop.f32.mrf.mxu0
        %v3173 = vadd.f32 %v3060, %v3172
        %3174 = vmatmul.f32.gmra.mxu0 %v3111
        %v3175 = vpop.f32.mrf.mxu0
        %v3176 = vadd.f32 %v3063, %v3175
        %3177 = vmatmul.f32.gmra.mxu0 %v3114
        %v3178 = vpop.f32.mrf.mxu0
        %v3179 = vadd.f32 %v3066, %v3178
        %3180 = vmatmul.f32.gmra.mxu0 %v3117
        %v3181 = vpop.f32.mrf.mxu0
        %v3182 = vadd.f32 %v3069, %v3181
        %3183 = vmatmul.f32.gmra.mxu0 %v3120
        %v3184 = vpop.f32.mrf.mxu0
        %v3185 = vadd.f32 %v3072, %v3184
        %3186 = vdwg.mxu0
        %s3187 = scalar_lea.vmem %s325, 128 [#allocation3]
        %3188 = vst.msk [vmem:[%s3187] sm:$0xff] %vm1476, %v3140
        %3189 = vst.msk [vmem:[%s3187 + $0x8] sm:$0xff] %vm1476, %v3143
        %3190 = vst.msk [vmem:[%s3187 + $0x10] sm:$0xff] %vm1476, %v3146
        %3191 = vst.msk [vmem:[%s3187 + $0x18] sm:$0xff] %vm1476, %v3149
        %3192 = vst.msk [vmem:[%s3187 + $0x20] sm:$0xff] %vm1476, %v3152
        %3193 = vst.msk [vmem:[%s3187 + $0x28] sm:$0xff] %vm1476, %v3155
        %3194 = vst.msk [vmem:[%s3187 + $0x30] sm:$0xff] %vm1476, %v3158
        %3195 = vst.msk [vmem:[%s3187 + $0x38] sm:$0xff] %vm1476, %v3161
        %3196 = vst.msk [vmem:[%s3187 + $0x40] sm:$0xff] %vm1476, %v3164
        %3197 = vst.msk [vmem:[%s3187 + $0x48] sm:$0xff] %vm1476, %v3167
        %3198 = vst.msk [vmem:[%s3187 + $0x50] sm:$0xff] %vm1476, %v3170
        %3199 = vst.msk [vmem:[%s3187 + $0x58] sm:$0xff] %vm1476, %v3173
        %3200 = vst.msk [vmem:[%s3187 + $0x60] sm:$0xff] %vm1476, %v3176
        %3201 = vst.msk [vmem:[%s3187 + $0x68] sm:$0xff] %vm1476, %v3179
        %3202 = vst.msk [vmem:[%s3187 + $0x70] sm:$0xff] %vm1476, %v3182
        %3203 = vst.msk [vmem:[%s3187 + $0x78] sm:$0xff] %vm1476, %v3185
        %s3204 = sand.u32 %s225, 1
        %s3205 = scalar_lea.sflag [#allocation4], %s3204
        %s3206 = sand.u32 %s225, 1
        %s3207 = smul.addr %s3206, 256
        %s3208 = scalar_lea.vmem [#allocation3], %s3207
        // Predicated region
        $region57: #{tpu_custom_call.1} parent=55 // pred_check
          %p3209 = pneg %p235
        $region58: #{tpu_custom_call.1} parent=55 // pred_check_branch
          %3211 = sbr.rel (%p3209) target = $region60
        $region59: #{tpu_custom_call.1} parent=55 // pred_region
          %3213 = vsyncadd %s3205, 0
          %s3214 = smul.addr %s23, 32
          %s3215 = smul.addr %s3214, 8
          %s3216 = scalar_lea.hbm %s9, %s3215
          %s3217 = sshll.u32 %s3208, 4
          %s3218 = int_to_ptr.vmem [resolvable:$true] %s3217
          %s3219 = sshll.u32 %s3216, 4
          %s3220 = int_to_ptr.hbm [resolvable:$true] %s3219
          %3225 = dma.vmem_to_hbm [thread:$0]  %s3218, 4096, %s3220, %s3205, 128, 128, 8
        $region60: #{tpu_custom_call.1} parent=55 // pred_fallthru
          _
      $region56: #{tpu_custom_call.1} parent=5 // pred_fallthru
        _
      %p3226 = scmp.le.s32.totalorder 2, %s18
      // Predicated region
      $region61: #{tpu_custom_call.1} parent=5 // pred_check
        %p3227 = pneg %p3226
      $region62: #{tpu_custom_call.1} parent=5 // pred_check_branch
        %3229 = sbr.rel (%p3227) target = $region64
      $region63: #{tpu_custom_call.1} parent=5 // pred_region
        %s3230 = ssub.s32 %s18, 2
        // Predicated region
        $region65: #{tpu_custom_call.1} parent=63 // pred_check
          %p3231 = pneg %p241
        $region66: #{tpu_custom_call.1} parent=63 // pred_check_branch
          %3233 = sbr.rel (%p3231) target = $region68
        $region67: #{tpu_custom_call.1} parent=63 // pred_region
          %s3234 = sand.u32 %s226, 1
          %s3235 = scalar_lea.sflag [#allocation4], %s3234
          %s3236 = sand.u32 %s226, 1
          %s3237 = smul.addr %s3236, 256
          %s3238 = scalar_lea.vmem [#allocation3], %s3237
          %3240 = dma.done %s3235, 4096
        $region68: #{tpu_custom_call.1} parent=63 // pred_fallthru
          _
      $region64: #{tpu_custom_call.1} parent=5 // pred_fallthru
        _
    $region6: #{tpu_custom_call.1} parent=1 // loop_footer
      %s22 = sadd.s32 1, %s18
    $region7: #{tpu_custom_call.1} parent=1 // loop_footer_branch
      %17 = sbr.rel target = $region3
    $region8: #{tpu_custom_call.1} parent=1 // loop_exit
      _
    %3241 = vsyncpa [#allocation4], 1
    %s3242 = scalar_lea.sflag [#allocation4], 1
    %3243 = vsyncpa %s3242, 1

</llo_original>
